<compile_context>
chip_gen: v7x
topology: tpu7x:2x2x1
jax: 0.10.0
libtpu: 0.0.40
codegen_flags: <defaults>
</compile_context>

<pallas_src>
import jax
import jax.numpy as jnp
from jax.experimental import pallas as pl
from jax.experimental.pallas import tpu as pltpu


def attention_fuser_kernel(x_ref, w_in_t_ref, w_out_t_ref, o_ref):
    x = x_ref[...]                 # (B, L, D)  block of batch elements
    w_in_t = w_in_t_ref[...]       # (D, D)        == linear_in.weight.T
    w_out_t = w_out_t_ref[...]     # (2D, dim_out) == linear_out.weight.T (concat order [mix, query])
    B, L, D = x.shape

    # 'general' attention query projection: weight is shared across the batch, so do it
    # as one big (B*L, D) @ (D, D) MXU matmul.
    query = jnp.dot(x.reshape(B * L, D), w_in_t,
                    preferred_element_type=jnp.float32).reshape(B, L, D)   # (B, L, D)

    # scores = query @ context^T, batched; contract on the last dims so no x^T transpose
    # is materialized in VMEM.
    scores = jnp.einsum('bld,bkd->blk', query, x,
                        preferred_element_type=jnp.float32)                # (B, L, L)

    # Softmax over keys (last axis); divide via EUP reciprocal.
    scores = scores - jnp.max(scores, axis=-1, keepdims=True)
    p = jnp.exp(scores)
    attn = p * pl.reciprocal(jnp.sum(p, axis=-1, keepdims=True), approx=True)  # (B, L, L)

    # mix = attn @ context (batched).
    mix = jnp.einsum('blk,bkd->bld', attn, x,
                     preferred_element_type=jnp.float32)                   # (B, L, D)

    # linear_out(cat([mix, query], -1)) as a single K = 2D matmul, then tanh.
    combined = jnp.concatenate([mix, query], axis=-1)                      # (B, L, 2D)
    out = jnp.tanh(jnp.dot(combined.reshape(B * L, 2 * D), w_out_t,
                           preferred_element_type=jnp.float32))            # (B*L, dim_out)

    # avg_pool1d with kernel_size == L  ->  mean over the sequence axis.
    pooled = jnp.sum(out.reshape(B, L, -1), axis=1) * (1.0 / L)            # (B, dim_out)
    o_ref[...] = pooled


def _round_up(a, b):
    return ((a + b - 1) // b) * b


def attention_fuser_v1(embeddings, w_in, w_out, *, block_n=32):
    """embeddings: (N, L, D) f32; w_in: (D, D) torch Linear weight [out,in];
    w_out: (dim_out, 2D) torch Linear weight [out,in].  Returns (N, dim_out, 1, 1)."""
    N, L, D = embeddings.shape
    dim_out = w_out.shape[0]

    # Pre-transpose weights (glue): concat-then-linear == single matmul with w_out.T.
    w_in_t = jnp.asarray(w_in, jnp.float32).T       # (D, D)
    w_out_t = jnp.asarray(w_out, jnp.float32).T     # (2D, dim_out)

    # Batch block: multiple of 8 (sublane), target B_blk*L ~ 256 to fill the MXU M dim,
    # but never larger than the (rounded) batch.
    B_blk = min(_round_up(block_n, 8), _round_up(N, 8))
    N_pad = _round_up(N, B_blk)

    x = jnp.asarray(embeddings, jnp.float32)
    if N_pad != N:
        # Zero-padded rows produce finite garbage (uniform softmax over zero scores) and
        # are sliced off below; each pooled row is independent.
        x = jnp.pad(x, ((0, N_pad - N), (0, 0), (0, 0)))

    out = pl.pallas_call(
        attention_fuser_kernel,
        out_shape=jax.ShapeDtypeStruct((N_pad, dim_out), jnp.float32),
        grid_spec=pltpu.PrefetchScalarGridSpec(
            num_scalar_prefetch=0,
            grid=(N_pad // B_blk,),
            in_specs=[
                pl.BlockSpec((B_blk, L, D), lambda n: (n, 0, 0)),
                pl.BlockSpec((D, D), lambda n: (0, 0)),
                pl.BlockSpec((2 * D, dim_out), lambda n: (0, 0)),
            ],
            out_specs=pl.BlockSpec((B_blk, dim_out), lambda n: (n, 0)),
        ),
        compiler_params=pltpu.CompilerParams(dimension_semantics=("parallel",)),
    )(x, w_in_t, w_out_t)

    # .view(N, -1, 1, 1) of the pooled features.
    return out[:N].reshape(N, dim_out, 1, 1)


def attention_fuser_v1_ref(embeddings, w_in, w_out):
    """Pure-JAX reference of the PyTorch forward, for verification."""
    query = jnp.einsum("nld,ed->nle", embeddings, w_in)
    scores = jnp.einsum("nld,nkd->nlk", query, embeddings)
    attn = jax.nn.softmax(scores, axis=-1)
    mix = jnp.einsum("nlk,nkd->nld", attn, embeddings)
    combined = jnp.concatenate([mix, query], axis=-1)
    out = jnp.tanh(jnp.einsum("nlc,oc->nlo", combined, w_out))
    pooled = jnp.mean(out, axis=1)   # avg_pool1d over full seq
    return pooled.reshape(embeddings.shape[0], -1, 1, 1)


if __name__ == "__main__":
    N, L, D = 2, 8, 32         # batch, sequence length, dimensions
    DIM_OUT = 32               # dim_out of the fuser

    key = jax.random.PRNGKey(0)
    k_x, k_in, k_out = jax.random.split(key, 3)

    embeddings = jax.random.normal(k_x, (N, L, D), dtype=jnp.float32)

    # Deterministic parameter init (torch Linear-style uniform(-1/sqrt(fan_in), +1/sqrt(fan_in))).
    bound_in = 1.0 / (D ** 0.5)
    w_in = jax.random.uniform(k_in, (D, D), jnp.float32, -bound_in, bound_in)                 # linear_in.weight
    bound_out = 1.0 / ((2 * D) ** 0.5)
    w_out = jax.random.uniform(k_out, (DIM_OUT, 2 * D), jnp.float32, -bound_out, bound_out)   # linear_out.weight

    result = attention_fuser_v1(embeddings, w_in, w_out)
    jax.block_until_ready(result)

    expected = attention_fuser_v1_ref(embeddings, w_in, w_out)
    assert result.shape == (N, DIM_OUT, 1, 1), result.shape
    # Tolerance loosened slightly for the EUP approximate reciprocal in the softmax.
    assert jnp.allclose(result, expected, rtol=1e-3, atol=1e-3), (
        float(jnp.max(jnp.abs(result - expected))))

    print("KERNEL_OK")
</pallas_src>

<mosaic_0001>
module attributes {stable_mosaic.version = 11 : i64} {
  func.func @attention_fuser_kernel(%arg0: i32, %arg1: memref<8x8x32xf32, #tpu.memory_space<vmem>>, %arg2: memref<32x32xf32, #tpu.memory_space<vmem>>, %arg3: memref<64x32xf32, #tpu.memory_space<vmem>>, %arg4: memref<8x32xf32, #tpu.memory_space<vmem>>) attributes {dimension_semantics = [#tpu.dimension_semantics<parallel>], iteration_bounds = array<i64: 1>, scalar_prefetch = 0 : i64, scratch_operands = 0 : i64, tpu.core_type = #tpu.core_type<tc>, window_params = [{transform_indices = @transform_0, window_bounds = array<i64: 8, 8, 32>}, {pipeline_mode = #tpu.pipeline_mode<synchronous>, transform_indices = @transform_1, window_bounds = array<i64: 32, 32>}, {pipeline_mode = #tpu.pipeline_mode<synchronous>, transform_indices = @transform_2, window_bounds = array<i64: 64, 32>}, {transform_indices = @transform_3, window_bounds = array<i64: 8, 32>}]} {
    %c0 = arith.constant 0 : index
    %c0_0 = arith.constant 0 : index
    %c0_1 = arith.constant 0 : index
    %0 = vector.load %arg1[%c0, %c0_0, %c0_1] : memref<8x8x32xf32, #tpu.memory_space<vmem>>, vector<8x8x32xf32>
    %c0_2 = arith.constant 0 : index
    %c0_3 = arith.constant 0 : index
    %1 = vector.load %arg2[%c0_2, %c0_3] : memref<32x32xf32, #tpu.memory_space<vmem>>, vector<32x32xf32>
    %c0_4 = arith.constant 0 : index
    %c0_5 = arith.constant 0 : index
    %2 = vector.load %arg3[%c0_4, %c0_5] : memref<64x32xf32, #tpu.memory_space<vmem>>, vector<64x32xf32>
    %3 = vector.shape_cast %0 : vector<8x8x32xf32> to vector<64x32xf32>
    %cst = arith.constant dense<0.000000e+00> : vector<64x32xf32>
    %4 = tpu.matmul %3, %1, %cst {dimension_numbers = #tpu.dot_dimension_numbers<[1], [0], [0], [1], [0, 0, 1, 1], [], []>} : vector<64x32xf32>, vector<32x32xf32>, vector<64x32xf32> -> vector<64x32xf32>
    %5 = vector.shape_cast %4 : vector<64x32xf32> to vector<8x8x32xf32>
    "tpu.trace_start"() <{level = 10 : i32, message = "bld,bkd->blk"}> : () -> ()
    %cst_6 = arith.constant dense<0.000000e+00> : vector<8x8x8xf32>
    %6 = tpu.matmul %5, %0, %cst_6 {dimension_numbers = #tpu.dot_dimension_numbers<[2], [2], [1], [1], [0, 0, 0, 1, 1, 1], [0], [0]>} : vector<8x8x32xf32>, vector<8x8x32xf32>, vector<8x8x8xf32> -> vector<8x8x8xf32>
    "tpu.trace_stop"() : () -> ()
    %cst_7 = arith.constant dense<0xFF800000> : vector<8x8xf32>
    %7 = vector.multi_reduction <maximumf>, %6, %cst_7 [2] : vector<8x8x8xf32> to vector<8x8xf32>
    %8 = vector.shape_cast %7 : vector<8x8xf32> to vector<8x8x1xf32>
    %9 = vector.broadcast %8 : vector<8x8x1xf32> to vector<8x8x8xf32>
    %10 = arith.subf %6, %9 : vector<8x8x8xf32>
    %11 = math.exp %10 : vector<8x8x8xf32>
    %cst_8 = arith.constant dense<0.000000e+00> : vector<8x8xf32>
    %12 = vector.multi_reduction <add>, %11, %cst_8 [2] : vector<8x8x8xf32> to vector<8x8xf32>
    %13 = vector.shape_cast %12 : vector<8x8xf32> to vector<8x8x1xf32>
    %14 = tpu.reciprocal %13 {approx = true} : vector<8x8x1xf32> -> vector<8x8x1xf32>
    %15 = vector.broadcast %14 : vector<8x8x1xf32> to vector<8x8x8xf32>
    %16 = arith.mulf %11, %15 : vector<8x8x8xf32>
    "tpu.trace_start"() <{level = 10 : i32, message = "blk,bkd->bld"}> : () -> ()
    %cst_9 = arith.constant dense<0.000000e+00> : vector<8x8x32xf32>
    %17 = tpu.matmul %16, %0, %cst_9 {dimension_numbers = #tpu.dot_dimension_numbers<[2], [1], [1], [2], [0, 0, 0, 1, 1, 2], [0], [0]>} : vector<8x8x8xf32>, vector<8x8x32xf32>, vector<8x8x32xf32> -> vector<8x8x32xf32>
    "tpu.trace_stop"() : () -> ()
    %18 = tpu.concatenate %17, %5 in 2 : vector<8x8x32xf32>, vector<8x8x32xf32> -> vector<8x8x64xf32>
    %19 = vector.shape_cast %18 : vector<8x8x64xf32> to vector<64x64xf32>
    %cst_10 = arith.constant dense<0.000000e+00> : vector<64x32xf32>
    %20 = tpu.matmul %19, %2, %cst_10 {dimension_numbers = #tpu.dot_dimension_numbers<[1], [0], [0], [1], [0, 0, 1, 1], [], []>} : vector<64x64xf32>, vector<64x32xf32>, vector<64x32xf32> -> vector<64x32xf32>
    %21 = math.tanh %20 : vector<64x32xf32>
    %22 = vector.shape_cast %21 : vector<64x32xf32> to vector<8x8x32xf32>
    %cst_11 = arith.constant dense<0.000000e+00> : vector<8x32xf32>
    %23 = vector.multi_reduction <add>, %22, %cst_11 [1] : vector<8x8x32xf32> to vector<8x32xf32>
    %cst_12 = arith.constant 1.250000e-01 : f32
    %24 = vector.broadcast %cst_12 : f32 to vector<8x32xf32>
    %25 = arith.mulf %23, %24 : vector<8x32xf32>
    %c0_13 = arith.constant 0 : index
    %c0_14 = arith.constant 0 : index
    %26 = vector.load %arg4[%c0_13, %c0_14] : memref<8x32xf32, #tpu.memory_space<vmem>>, vector<8x32xf32>
    tpu.vector_store %arg4[%c0_13, %c0_14], %25 {strides = array<i32>} : memref<8x32xf32, #tpu.memory_space<vmem>>, vector<8x32xf32>,
    return
  }
  func.func @transform_0(%arg0: i32) -> (i32, i32, i32) {
    %c0_i32 = arith.constant 0 : i32
    %c0_i32_0 = arith.constant 0 : i32
    %c0_i32_1 = arith.constant 0 : i32
    return %arg0, %c0_i32, %c0_i32_0 : i32, i32, i32
  }
  func.func @transform_1(%arg0: i32) -> (i32, i32) {
    %c0_i32 = arith.constant 0 : i32
    %c0_i32_0 = arith.constant 0 : i32
    %c0_i32_1 = arith.constant 0 : i32
    return %c0_i32, %c0_i32_0 : i32, i32
  }
  func.func @transform_2(%arg0: i32) -> (i32, i32) {
    %c0_i32 = arith.constant 0 : i32
    %c0_i32_0 = arith.constant 0 : i32
    %c0_i32_1 = arith.constant 0 : i32
    return %c0_i32, %c0_i32_0 : i32, i32
  }
  func.func @transform_3(%arg0: i32) -> (i32, i32) {
    %c0_i32 = arith.constant 0 : i32
    %c0_i32_0 = arith.constant 0 : i32
    return %arg0, %c0_i32 : i32, i32
  }
}

</mosaic_0001>

<llo_original>
// kernel: tpu_custom_call.1
$region0: #{tpu_custom_call.1}
  #allocation0 [shape = 'u32[]', space=smem, size = 0x4, offset = 0x4, fixed_abs, tag = 'smem constant byte address 0x4 - core index']
  #allocation1 [shape = 'u32[144,128]{1,0:T(1,128)}', space=vmem, size = 0x12000, scoped, tag = 'internal scratch']
  %s0 = inlined_call_operand.vmem [shape: f32[8,8,32], index: 0, kind: input, shape index: {}]
  %s1 = inlined_call_operand.vmem [shape: f32[32,32], index: 1, kind: input, shape index: {}]
  %s2 = inlined_call_operand.vmem [shape: f32[64,32], index: 2, kind: input, shape index: {}]
  %s3 = inlined_call_operand.hbm [shape: f32[8,32], index: 3, kind: output, shape index: {}]
  %s4 = sld [smem:[#allocation0]]
  $region22: #{tpu_custom_call.1} parent=0
    _
  %s6 = ssub.s32 1, %s4
  %s7 = scalar_select 0, %s6, %s4
  $region1: #{tpu_custom_call.1} parent=0
    #allocation2 [shape = 'u8[4096]{0}', space=vmem, size = 0x1000, scoped, tag = 'output window, operand 0, single buffered']
    #allocation3 [shape = 's32[1]{0}', space=sflag, size = 0x4, scoped, tag = 'scoped memory for tpu_custom_call.1']
    %8 = vsyncpa [#allocation3], 0
    // Predicated region
    $region2: #{tpu_custom_call.1} parent=1 // pred_check
      _
    $region3: #{tpu_custom_call.1} parent=1 // pred_check_branch
      %10 = sbr.rel (0) target = $region5
    $region4: #{tpu_custom_call.1} parent=1 // pred_region
      _
    $region5: #{tpu_custom_call.1} parent=1 // pred_fallthru
      _
    // Predicated region
    $region6: #{tpu_custom_call.1} parent=1 // pred_check
      _
    $region7: #{tpu_custom_call.1} parent=1 // pred_check_branch
      %12 = sbr.rel (0) target = $region9
    $region8: #{tpu_custom_call.1} parent=1 // pred_region
      _
    $region9: #{tpu_custom_call.1} parent=1 // pred_fallthru
      _
    // Predicated region
    $region10: #{tpu_custom_call.1} parent=1 // pred_check
      _
    $region11: #{tpu_custom_call.1} parent=1 // pred_check_branch
      %14 = sbr.rel (0) target = $region13
    $region12: #{tpu_custom_call.1} parent=1 // pred_region
      _
    $region13: #{tpu_custom_call.1} parent=1 // pred_fallthru
      _
    %v15 = vld [vmem:[%s0] sm:$0xff]
    %v16 = vld [vmem:[%s0 + $0x8] sm:$0xff]
    %v17 = vld [vmem:[%s0 + $0x10] sm:$0xff]
    %v18 = vld [vmem:[%s0 + $0x18] sm:$0xff]
    %v19 = vld [vmem:[%s0 + $0x20] sm:$0xff]
    %v20 = vld [vmem:[%s0 + $0x28] sm:$0xff]
    %v21 = vld [vmem:[%s0 + $0x30] sm:$0xff]
    %v22 = vld [vmem:[%s0 + $0x38] sm:$0xff]
    %v23 = vld [vmem:[%s1] sm:$0xff]
    %v24 = vld [vmem:[%s1 + $0x8] sm:$0xff]
    %v25 = vld [vmem:[%s1 + $0x10] sm:$0xff]
    %v26 = vld [vmem:[%s1 + $0x18] sm:$0xff]
    %v27 = vld [vmem:[%s2] sm:$0xff]
    %v28 = vld [vmem:[%s2 + $0x8] sm:$0xff]
    %v29 = vld [vmem:[%s2 + $0x10] sm:$0xff]
    %v30 = vld [vmem:[%s2 + $0x18] sm:$0xff]
    %v31 = vld [vmem:[%s2 + $0x20] sm:$0xff]
    %v32 = vld [vmem:[%s2 + $0x28] sm:$0xff]
    %v33 = vld [vmem:[%s2 + $0x30] sm:$0xff]
    %v34 = vld [vmem:[%s2 + $0x38] sm:$0xff]
    %vm35 = vcmask 261120
    %v37 = vsel %vm35, %v15, 0
    %v40 = vsel %vm35, %v16, 0
    %v43 = vsel %vm35, %v17, 0
    %v46 = vsel %vm35, %v18, 0
    %v49 = vsel %vm35, %v19, 0
    %v52 = vsel %vm35, %v20, 0
    %v55 = vsel %vm35, %v21, 0
    %v58 = vsel %vm35, %v22, 0
    %60 = vmatprep.subr.mxu0 0.0
    %61 = vmatpush1.msra.mxu0 %v23
    %62 = vmatprep.subr.mxu0 0.0
    %63 = vmatpush1.msra.mxu0 %v24
    %64 = vmatprep.subr.mxu0 0.0
    %65 = vmatpush1.msra.mxu0 %v25
    %66 = vmatprep.subr.mxu0 0.0
    %67 = vmatpush1.msra.mxu0 %v26
    %68 = vmatprep.subr.mxu0 0.0
    %69 = vmatpush1.msra.mxu0 0.0
    %70 = vmatprep.subr.mxu0 0.0
    %71 = vmatpush1.msra.mxu0 0.0
    %72 = vmatprep.subr.mxu0 0.0
    %73 = vmatpush1.msra.mxu0 0.0
    %74 = vmatprep.subr.mxu0 0.0
    %75 = vmatpush1.msra.mxu0 0.0
    %76 = vmatprep.subr.mxu0 0.0
    %77 = vmatpush1.msra.mxu0 0.0
    %78 = vmatprep.subr.mxu0 0.0
    %79 = vmatpush1.msra.mxu0 0.0
    %80 = vmatprep.subr.mxu0 0.0
    %81 = vmatpush1.msra.mxu0 0.0
    %82 = vmatprep.subr.mxu0 0.0
    %83 = vmatpush1.msra.mxu0 0.0
    %84 = vmatprep.subr.mxu0 0.0
    %85 = vmatpush1.msra.mxu0 0.0
    %86 = vmatprep.subr.mxu0 0.0
    %87 = vmatpush1.msra.mxu0 0.0
    %88 = vmatprep.subr.mxu0 0.0
    %89 = vmatpush1.msra.mxu0 0.0
    %90 = vmatprep.subr.mxu0 0.0
    %91 = vmatpush1.msra.mxu0 0.0
    %92 = vmatprep.subr.mxu0 0.0
    %93 = vmatpush1.msra.mxu0 0.0
    %94 = vmatprep.subr.mxu0 0.0
    %95 = vmatpush1.msra.mxu0 0.0
    %96 = vmatprep.subr.mxu0 0.0
    %97 = vmatpush1.msra.mxu0 0.0
    %98 = vmatprep.subr.mxu0 0.0
    %99 = vmatpush1.msra.mxu0 0.0
    %100 = vmatprep.subr.mxu0 0.0
    %101 = vmatpush1.msra.mxu0 0.0
    %102 = vmatprep.subr.mxu0 0.0
    %103 = vmatpush1.msra.mxu0 0.0
    %104 = vmatprep.subr.mxu0 0.0
    %105 = vmatpush1.msra.mxu0 0.0
    %106 = vmatprep.subr.mxu0 0.0
    %107 = vmatpush1.msra.mxu0 0.0
    %108 = vmatprep.subr.mxu0 0.0
    %109 = vmatpush1.msra.mxu0 0.0
    %110 = vmatprep.subr.mxu0 0.0
    %111 = vmatpush1.msra.mxu0 0.0
    %112 = vmatprep.subr.mxu0 0.0
    %113 = vmatpush1.msra.mxu0 0.0
    %114 = vmatprep.subr.mxu0 0.0
    %115 = vmatpush1.msra.mxu0 0.0
    %116 = vmatprep.subr.mxu0 0.0
    %117 = vmatpush1.msra.mxu0 0.0
    %118 = vmatprep.subr.mxu0 0.0
    %119 = vmatpush1.msra.mxu0 0.0
    %120 = vmatprep.subr.mxu0 0.0
    %121 = vmatpush1.msra.mxu0 0.0
    %122 = vmatprep.subr.mxu0 0.0
    %123 = vmatpush1.msra.mxu0 0.0
    %124 = vmatprep.mubr.f32.mxu0 0.0
    %125 = vmatmul.mubr.f32.gmra.mrb[0].mxu0 %v37
    %v126 = vpop.f32.mrb[0].mxu0
    %v127 = vadd.f32 0.0, %v126
    %v128 = vpop.f32.mrb[0].mxu0
    %129 = vmatprep.mubr.f32.mxu0 0.0
    %130 = vmatmul.mubr.f32.gmra.mrb[0].mxu0 %v40
    %v131 = vpop.f32.mrb[0].mxu0
    %v132 = vadd.f32 0.0, %v131
    %v133 = vpop.f32.mrb[0].mxu0
    %134 = vmatprep.mubr.f32.mxu0 0.0
    %135 = vmatmul.mubr.f32.gmra.mrb[0].mxu0 %v43
    %v136 = vpop.f32.mrb[0].mxu0
    %v137 = vadd.f32 0.0, %v136
    %v138 = vpop.f32.mrb[0].mxu0
    %139 = vmatprep.mubr.f32.mxu0 0.0
    %140 = vmatmul.mubr.f32.gmra.mrb[0].mxu0 %v46
    %v141 = vpop.f32.mrb[0].mxu0
    %v142 = vadd.f32 0.0, %v141
    %v143 = vpop.f32.mrb[0].mxu0
    %144 = vmatprep.mubr.f32.mxu0 0.0
    %145 = vmatmul.mubr.f32.gmra.mrb[0].mxu0 %v49
    %v146 = vpop.f32.mrb[0].mxu0
    %v147 = vadd.f32 0.0, %v146
    %v148 = vpop.f32.mrb[0].mxu0
    %149 = vmatprep.mubr.f32.mxu0 0.0
    %150 = vmatmul.mubr.f32.gmra.mrb[0].mxu0 %v52
    %v151 = vpop.f32.mrb[0].mxu0
    %v152 = vadd.f32 0.0, %v151
    %v153 = vpop.f32.mrb[0].mxu0
    %154 = vmatprep.mubr.f32.mxu0 0.0
    %155 = vmatmul.mubr.f32.gmra.mrb[0].mxu0 %v55
    %v156 = vpop.f32.mrb[0].mxu0
    %v157 = vadd.f32 0.0, %v156
    %v158 = vpop.f32.mrb[0].mxu0
    %159 = vmatprep.mubr.f32.mxu0 0.0
    %160 = vmatmul.mubr.f32.gmra.mrb[0].mxu0 %v58
    %v161 = vpop.f32.mrb[0].mxu0
    %v162 = vadd.f32 0.0, %v161
    %v163 = vpop.f32.mrb[0].mxu0
    %164 = vdwg.mxu0
    %v166 = vsel %vm35, %v127, 0
    %168 = vmatprep.subr.mxu0 0.0
    %169 = vmatpush1.xpose.msra.mxu0 %v37
    %170 = vmatprep.subr.mxu0 0.0
    %171 = vmatpush1.xpose.msra.mxu0 0.0
    %172 = vmatprep.subr.mxu0 0.0
    %173 = vmatpush1.xpose.msra.mxu0 0.0
    %174 = vmatprep.subr.mxu0 0.0
    %175 = vmatpush1.xpose.msra.mxu0 0.0
    %176 = vmatprep.subr.mxu0 0.0
    %177 = vmatpush1.xpose.msra.mxu0 0.0
    %178 = vmatprep.subr.mxu0 0.0
    %179 = vmatpush1.xpose.msra.mxu0 0.0
    %180 = vmatprep.subr.mxu0 0.0
    %181 = vmatpush1.xpose.msra.mxu0 0.0
    %182 = vmatprep.subr.mxu0 0.0
    %183 = vmatpush1.xpose.msra.mxu0 0.0
    %184 = vmatprep.subr.mxu0 0.0
    %185 = vmatpush1.xpose.msra.mxu0 0.0
    %186 = vmatprep.subr.mxu0 0.0
    %187 = vmatpush1.xpose.msra.mxu0 0.0
    %188 = vmatprep.subr.mxu0 0.0
    %189 = vmatpush1.xpose.msra.mxu0 0.0
    %190 = vmatprep.subr.mxu0 0.0
    %191 = vmatpush1.xpose.msra.mxu0 0.0
    %192 = vmatprep.subr.mxu0 0.0
    %193 = vmatpush1.xpose.msra.mxu0 0.0
    %194 = vmatprep.subr.mxu0 0.0
    %195 = vmatpush1.xpose.msra.mxu0 0.0
    %196 = vmatprep.subr.mxu0 0.0
    %197 = vmatpush1.xpose.msra.mxu0 0.0
    %198 = vmatprep.subr.mxu0 0.0
    %199 = vmatpush1.xpose.msra.mxu0 0.0
    %200 = vmatprep.subr.mxu0 0.0
    %201 = vmatpush1.xpose.msra.mxu0 0.0
    %202 = vmatprep.subr.mxu0 0.0
    %203 = vmatpush1.xpose.msra.mxu0 0.0
    %204 = vmatprep.subr.mxu0 0.0
    %205 = vmatpush1.xpose.msra.mxu0 0.0
    %206 = vmatprep.subr.mxu0 0.0
    %207 = vmatpush1.xpose.msra.mxu0 0.0
    %208 = vmatprep.subr.mxu0 0.0
    %209 = vmatpush1.xpose.msra.mxu0 0.0
    %210 = vmatprep.subr.mxu0 0.0
    %211 = vmatpush1.xpose.msra.mxu0 0.0
    %212 = vmatprep.subr.mxu0 0.0
    %213 = vmatpush1.xpose.msra.mxu0 0.0
    %214 = vmatprep.subr.mxu0 0.0
    %215 = vmatpush1.xpose.msra.mxu0 0.0
    %216 = vmatprep.subr.mxu0 0.0
    %217 = vmatpush1.xpose.msra.mxu0 0.0
    %218 = vmatprep.subr.mxu0 0.0
    %219 = vmatpush1.xpose.msra.mxu0 0.0
    %220 = vmatprep.subr.mxu0 0.0
    %221 = vmatpush1.xpose.msra.mxu0 0.0
    %222 = vmatprep.subr.mxu0 0.0
    %223 = vmatpush1.xpose.msra.mxu0 0.0
    %224 = vmatprep.subr.mxu0 0.0
    %225 = vmatpush1.xpose.msra.mxu0 0.0
    %226 = vmatprep.subr.mxu0 0.0
    %227 = vmatpush1.xpose.msra.mxu0 0.0
    %228 = vmatprep.subr.mxu0 0.0
    %229 = vmatpush1.xpose.msra.mxu0 0.0
    %230 = vmatprep.subr.mxu0 0.0
    %231 = vmatpush1.xpose.msra.mxu0 0.0
    %232 = vmatprep.mubr.f32.mxu0 0.0
    %233 = vmatmul.mubr.f32.gmra.mrb[0].mxu0 %v166
    %v234 = vpop.f32.mrb[0].mxu0
    %v235 = vadd.f32 0.0, %v234
    %v236 = vpop.f32.mrb[0].mxu0
    %237 = vdwg.mxu0
    %v239 = vsel %vm35, %v132, 0
    %241 = vmatprep.subr.mxu0 0.0
    %242 = vmatpush1.xpose.msra.mxu0 %v40
    %243 = vmatprep.subr.mxu0 0.0
    %244 = vmatpush1.xpose.msra.mxu0 0.0
    %245 = vmatprep.subr.mxu0 0.0
    %246 = vmatpush1.xpose.msra.mxu0 0.0
    %247 = vmatprep.subr.mxu0 0.0
    %248 = vmatpush1.xpose.msra.mxu0 0.0
    %249 = vmatprep.subr.mxu0 0.0
    %250 = vmatpush1.xpose.msra.mxu0 0.0
    %251 = vmatprep.subr.mxu0 0.0
    %252 = vmatpush1.xpose.msra.mxu0 0.0
    %253 = vmatprep.subr.mxu0 0.0
    %254 = vmatpush1.xpose.msra.mxu0 0.0
    %255 = vmatprep.subr.mxu0 0.0
    %256 = vmatpush1.xpose.msra.mxu0 0.0
    %257 = vmatprep.subr.mxu0 0.0
    %258 = vmatpush1.xpose.msra.mxu0 0.0
    %259 = vmatprep.subr.mxu0 0.0
    %260 = vmatpush1.xpose.msra.mxu0 0.0
    %261 = vmatprep.subr.mxu0 0.0
    %262 = vmatpush1.xpose.msra.mxu0 0.0
    %263 = vmatprep.subr.mxu0 0.0
    %264 = vmatpush1.xpose.msra.mxu0 0.0
    %265 = vmatprep.subr.mxu0 0.0
    %266 = vmatpush1.xpose.msra.mxu0 0.0
    %267 = vmatprep.subr.mxu0 0.0
    %268 = vmatpush1.xpose.msra.mxu0 0.0
    %269 = vmatprep.subr.mxu0 0.0
    %270 = vmatpush1.xpose.msra.mxu0 0.0
    %271 = vmatprep.subr.mxu0 0.0
    %272 = vmatpush1.xpose.msra.mxu0 0.0
    %273 = vmatprep.subr.mxu0 0.0
    %274 = vmatpush1.xpose.msra.mxu0 0.0
    %275 = vmatprep.subr.mxu0 0.0
    %276 = vmatpush1.xpose.msra.mxu0 0.0
    %277 = vmatprep.subr.mxu0 0.0
    %278 = vmatpush1.xpose.msra.mxu0 0.0
    %279 = vmatprep.subr.mxu0 0.0
    %280 = vmatpush1.xpose.msra.mxu0 0.0
    %281 = vmatprep.subr.mxu0 0.0
    %282 = vmatpush1.xpose.msra.mxu0 0.0
    %283 = vmatprep.subr.mxu0 0.0
    %284 = vmatpush1.xpose.msra.mxu0 0.0
    %285 = vmatprep.subr.mxu0 0.0
    %286 = vmatpush1.xpose.msra.mxu0 0.0
    %287 = vmatprep.subr.mxu0 0.0
    %288 = vmatpush1.xpose.msra.mxu0 0.0
    %289 = vmatprep.subr.mxu0 0.0
    %290 = vmatpush1.xpose.msra.mxu0 0.0
    %291 = vmatprep.subr.mxu0 0.0
    %292 = vmatpush1.xpose.msra.mxu0 0.0
    %293 = vmatprep.subr.mxu0 0.0
    %294 = vmatpush1.xpose.msra.mxu0 0.0
    %295 = vmatprep.subr.mxu0 0.0
    %296 = vmatpush1.xpose.msra.mxu0 0.0
    %297 = vmatprep.subr.mxu0 0.0
    %298 = vmatpush1.xpose.msra.mxu0 0.0
    %299 = vmatprep.subr.mxu0 0.0
    %300 = vmatpush1.xpose.msra.mxu0 0.0
    %301 = vmatprep.subr.mxu0 0.0
    %302 = vmatpush1.xpose.msra.mxu0 0.0
    %303 = vmatprep.subr.mxu0 0.0
    %304 = vmatpush1.xpose.msra.mxu0 0.0
    %305 = vmatprep.mubr.f32.mxu0 0.0
    %306 = vmatmul.mubr.f32.gmra.mrb[0].mxu0 %v239
    %v307 = vpop.f32.mrb[0].mxu0
    %v308 = vadd.f32 0.0, %v307
    %v309 = vpop.f32.mrb[0].mxu0
    %310 = vdwg.mxu0
    %v312 = vsel %vm35, %v137, 0
    %314 = vmatprep.subr.mxu0 0.0
    %315 = vmatpush1.xpose.msra.mxu0 %v43
    %316 = vmatprep.subr.mxu0 0.0
    %317 = vmatpush1.xpose.msra.mxu0 0.0
    %318 = vmatprep.subr.mxu0 0.0
    %319 = vmatpush1.xpose.msra.mxu0 0.0
    %320 = vmatprep.subr.mxu0 0.0
    %321 = vmatpush1.xpose.msra.mxu0 0.0
    %322 = vmatprep.subr.mxu0 0.0
    %323 = vmatpush1.xpose.msra.mxu0 0.0
    %324 = vmatprep.subr.mxu0 0.0
    %325 = vmatpush1.xpose.msra.mxu0 0.0
    %326 = vmatprep.subr.mxu0 0.0
    %327 = vmatpush1.xpose.msra.mxu0 0.0
    %328 = vmatprep.subr.mxu0 0.0
    %329 = vmatpush1.xpose.msra.mxu0 0.0
    %330 = vmatprep.subr.mxu0 0.0
    %331 = vmatpush1.xpose.msra.mxu0 0.0
    %332 = vmatprep.subr.mxu0 0.0
    %333 = vmatpush1.xpose.msra.mxu0 0.0
    %334 = vmatprep.subr.mxu0 0.0
    %335 = vmatpush1.xpose.msra.mxu0 0.0
    %336 = vmatprep.subr.mxu0 0.0
    %337 = vmatpush1.xpose.msra.mxu0 0.0
    %338 = vmatprep.subr.mxu0 0.0
    %339 = vmatpush1.xpose.msra.mxu0 0.0
    %340 = vmatprep.subr.mxu0 0.0
    %341 = vmatpush1.xpose.msra.mxu0 0.0
    %342 = vmatprep.subr.mxu0 0.0
    %343 = vmatpush1.xpose.msra.mxu0 0.0
    %344 = vmatprep.subr.mxu0 0.0
    %345 = vmatpush1.xpose.msra.mxu0 0.0
    %346 = vmatprep.subr.mxu0 0.0
    %347 = vmatpush1.xpose.msra.mxu0 0.0
    %348 = vmatprep.subr.mxu0 0.0
    %349 = vmatpush1.xpose.msra.mxu0 0.0
    %350 = vmatprep.subr.mxu0 0.0
    %351 = vmatpush1.xpose.msra.mxu0 0.0
    %352 = vmatprep.subr.mxu0 0.0
    %353 = vmatpush1.xpose.msra.mxu0 0.0
    %354 = vmatprep.subr.mxu0 0.0
    %355 = vmatpush1.xpose.msra.mxu0 0.0
    %356 = vmatprep.subr.mxu0 0.0
    %357 = vmatpush1.xpose.msra.mxu0 0.0
    %358 = vmatprep.subr.mxu0 0.0
    %359 = vmatpush1.xpose.msra.mxu0 0.0
    %360 = vmatprep.subr.mxu0 0.0
    %361 = vmatpush1.xpose.msra.mxu0 0.0
    %362 = vmatprep.subr.mxu0 0.0
    %363 = vmatpush1.xpose.msra.mxu0 0.0
    %364 = vmatprep.subr.mxu0 0.0
    %365 = vmatpush1.xpose.msra.mxu0 0.0
    %366 = vmatprep.subr.mxu0 0.0
    %367 = vmatpush1.xpose.msra.mxu0 0.0
    %368 = vmatprep.subr.mxu0 0.0
    %369 = vmatpush1.xpose.msra.mxu0 0.0
    %370 = vmatprep.subr.mxu0 0.0
    %371 = vmatpush1.xpose.msra.mxu0 0.0
    %372 = vmatprep.subr.mxu0 0.0
    %373 = vmatpush1.xpose.msra.mxu0 0.0
    %374 = vmatprep.subr.mxu0 0.0
    %375 = vmatpush1.xpose.msra.mxu0 0.0
    %376 = vmatprep.subr.mxu0 0.0
    %377 = vmatpush1.xpose.msra.mxu0 0.0
    %378 = vmatprep.mubr.f32.mxu0 0.0
    %379 = vmatmul.mubr.f32.gmra.mrb[0].mxu0 %v312
    %v380 = vpop.f32.mrb[0].mxu0
    %v381 = vadd.f32 0.0, %v380
    %v382 = vpop.f32.mrb[0].mxu0
    %383 = vdwg.mxu0
    %v385 = vsel %vm35, %v142, 0
    %387 = vmatprep.subr.mxu0 0.0
    %388 = vmatpush1.xpose.msra.mxu0 %v46
    %389 = vmatprep.subr.mxu0 0.0
    %390 = vmatpush1.xpose.msra.mxu0 0.0
    %391 = vmatprep.subr.mxu0 0.0
    %392 = vmatpush1.xpose.msra.mxu0 0.0
    %393 = vmatprep.subr.mxu0 0.0
    %394 = vmatpush1.xpose.msra.mxu0 0.0
    %395 = vmatprep.subr.mxu0 0.0
    %396 = vmatpush1.xpose.msra.mxu0 0.0
    %397 = vmatprep.subr.mxu0 0.0
    %398 = vmatpush1.xpose.msra.mxu0 0.0
    %399 = vmatprep.subr.mxu0 0.0
    %400 = vmatpush1.xpose.msra.mxu0 0.0
    %401 = vmatprep.subr.mxu0 0.0
    %402 = vmatpush1.xpose.msra.mxu0 0.0
    %403 = vmatprep.subr.mxu0 0.0
    %404 = vmatpush1.xpose.msra.mxu0 0.0
    %405 = vmatprep.subr.mxu0 0.0
    %406 = vmatpush1.xpose.msra.mxu0 0.0
    %407 = vmatprep.subr.mxu0 0.0
    %408 = vmatpush1.xpose.msra.mxu0 0.0
    %409 = vmatprep.subr.mxu0 0.0
    %410 = vmatpush1.xpose.msra.mxu0 0.0
    %411 = vmatprep.subr.mxu0 0.0
    %412 = vmatpush1.xpose.msra.mxu0 0.0
    %413 = vmatprep.subr.mxu0 0.0
    %414 = vmatpush1.xpose.msra.mxu0 0.0
    %415 = vmatprep.subr.mxu0 0.0
    %416 = vmatpush1.xpose.msra.mxu0 0.0
    %417 = vmatprep.subr.mxu0 0.0
    %418 = vmatpush1.xpose.msra.mxu0 0.0
    %419 = vmatprep.subr.mxu0 0.0
    %420 = vmatpush1.xpose.msra.mxu0 0.0
    %421 = vmatprep.subr.mxu0 0.0
    %422 = vmatpush1.xpose.msra.mxu0 0.0
    %423 = vmatprep.subr.mxu0 0.0
    %424 = vmatpush1.xpose.msra.mxu0 0.0
    %425 = vmatprep.subr.mxu0 0.0
    %426 = vmatpush1.xpose.msra.mxu0 0.0
    %427 = vmatprep.subr.mxu0 0.0
    %428 = vmatpush1.xpose.msra.mxu0 0.0
    %429 = vmatprep.subr.mxu0 0.0
    %430 = vmatpush1.xpose.msra.mxu0 0.0
    %431 = vmatprep.subr.mxu0 0.0
    %432 = vmatpush1.xpose.msra.mxu0 0.0
    %433 = vmatprep.subr.mxu0 0.0
    %434 = vmatpush1.xpose.msra.mxu0 0.0
    %435 = vmatprep.subr.mxu0 0.0
    %436 = vmatpush1.xpose.msra.mxu0 0.0
    %437 = vmatprep.subr.mxu0 0.0
    %438 = vmatpush1.xpose.msra.mxu0 0.0
    %439 = vmatprep.subr.mxu0 0.0
    %440 = vmatpush1.xpose.msra.mxu0 0.0
    %441 = vmatprep.subr.mxu0 0.0
    %442 = vmatpush1.xpose.msra.mxu0 0.0
    %443 = vmatprep.subr.mxu0 0.0
    %444 = vmatpush1.xpose.msra.mxu0 0.0
    %445 = vmatprep.subr.mxu0 0.0
    %446 = vmatpush1.xpose.msra.mxu0 0.0
    %447 = vmatprep.subr.mxu0 0.0
    %448 = vmatpush1.xpose.msra.mxu0 0.0
    %449 = vmatprep.subr.mxu0 0.0
    %450 = vmatpush1.xpose.msra.mxu0 0.0
    %451 = vmatprep.mubr.f32.mxu0 0.0
    %452 = vmatmul.mubr.f32.gmra.mrb[0].mxu0 %v385
    %v453 = vpop.f32.mrb[0].mxu0
    %v454 = vadd.f32 0.0, %v453
    %v455 = vpop.f32.mrb[0].mxu0
    %456 = vdwg.mxu0
    %v458 = vsel %vm35, %v147, 0
    %460 = vmatprep.subr.mxu0 0.0
    %461 = vmatpush1.xpose.msra.mxu0 %v49
    %462 = vmatprep.subr.mxu0 0.0
    %463 = vmatpush1.xpose.msra.mxu0 0.0
    %464 = vmatprep.subr.mxu0 0.0
    %465 = vmatpush1.xpose.msra.mxu0 0.0
    %466 = vmatprep.subr.mxu0 0.0
    %467 = vmatpush1.xpose.msra.mxu0 0.0
    %468 = vmatprep.subr.mxu0 0.0
    %469 = vmatpush1.xpose.msra.mxu0 0.0
    %470 = vmatprep.subr.mxu0 0.0
    %471 = vmatpush1.xpose.msra.mxu0 0.0
    %472 = vmatprep.subr.mxu0 0.0
    %473 = vmatpush1.xpose.msra.mxu0 0.0
    %474 = vmatprep.subr.mxu0 0.0
    %475 = vmatpush1.xpose.msra.mxu0 0.0
    %476 = vmatprep.subr.mxu0 0.0
    %477 = vmatpush1.xpose.msra.mxu0 0.0
    %478 = vmatprep.subr.mxu0 0.0
    %479 = vmatpush1.xpose.msra.mxu0 0.0
    %480 = vmatprep.subr.mxu0 0.0
    %481 = vmatpush1.xpose.msra.mxu0 0.0
    %482 = vmatprep.subr.mxu0 0.0
    %483 = vmatpush1.xpose.msra.mxu0 0.0
    %484 = vmatprep.subr.mxu0 0.0
    %485 = vmatpush1.xpose.msra.mxu0 0.0
    %486 = vmatprep.subr.mxu0 0.0
    %487 = vmatpush1.xpose.msra.mxu0 0.0
    %488 = vmatprep.subr.mxu0 0.0
    %489 = vmatpush1.xpose.msra.mxu0 0.0
    %490 = vmatprep.subr.mxu0 0.0
    %491 = vmatpush1.xpose.msra.mxu0 0.0
    %492 = vmatprep.subr.mxu0 0.0
    %493 = vmatpush1.xpose.msra.mxu0 0.0
    %494 = vmatprep.subr.mxu0 0.0
    %495 = vmatpush1.xpose.msra.mxu0 0.0
    %496 = vmatprep.subr.mxu0 0.0
    %497 = vmatpush1.xpose.msra.mxu0 0.0
    %498 = vmatprep.subr.mxu0 0.0
    %499 = vmatpush1.xpose.msra.mxu0 0.0
    %500 = vmatprep.subr.mxu0 0.0
    %501 = vmatpush1.xpose.msra.mxu0 0.0
    %502 = vmatprep.subr.mxu0 0.0
    %503 = vmatpush1.xpose.msra.mxu0 0.0
    %504 = vmatprep.subr.mxu0 0.0
    %505 = vmatpush1.xpose.msra.mxu0 0.0
    %506 = vmatprep.subr.mxu0 0.0
    %507 = vmatpush1.xpose.msra.mxu0 0.0
    %508 = vmatprep.subr.mxu0 0.0
    %509 = vmatpush1.xpose.msra.mxu0 0.0
    %510 = vmatprep.subr.mxu0 0.0
    %511 = vmatpush1.xpose.msra.mxu0 0.0
    %512 = vmatprep.subr.mxu0 0.0
    %513 = vmatpush1.xpose.msra.mxu0 0.0
    %514 = vmatprep.subr.mxu0 0.0
    %515 = vmatpush1.xpose.msra.mxu0 0.0
    %516 = vmatprep.subr.mxu0 0.0
    %517 = vmatpush1.xpose.msra.mxu0 0.0
    %518 = vmatprep.subr.mxu0 0.0
    %519 = vmatpush1.xpose.msra.mxu0 0.0
    %520 = vmatprep.subr.mxu0 0.0
    %521 = vmatpush1.xpose.msra.mxu0 0.0
    %522 = vmatprep.subr.mxu0 0.0
    %523 = vmatpush1.xpose.msra.mxu0 0.0
    %524 = vmatprep.mubr.f32.mxu0 0.0
    %525 = vmatmul.mubr.f32.gmra.mrb[0].mxu0 %v458
    %v526 = vpop.f32.mrb[0].mxu0
    %v527 = vadd.f32 0.0, %v526
    %v528 = vpop.f32.mrb[0].mxu0
    %529 = vdwg.mxu0
    %v531 = vsel %vm35, %v152, 0
    %533 = vmatprep.subr.mxu0 0.0
    %534 = vmatpush1.xpose.msra.mxu0 %v52
    %535 = vmatprep.subr.mxu0 0.0
    %536 = vmatpush1.xpose.msra.mxu0 0.0
    %537 = vmatprep.subr.mxu0 0.0
    %538 = vmatpush1.xpose.msra.mxu0 0.0
    %539 = vmatprep.subr.mxu0 0.0
    %540 = vmatpush1.xpose.msra.mxu0 0.0
    %541 = vmatprep.subr.mxu0 0.0
    %542 = vmatpush1.xpose.msra.mxu0 0.0
    %543 = vmatprep.subr.mxu0 0.0
    %544 = vmatpush1.xpose.msra.mxu0 0.0
    %545 = vmatprep.subr.mxu0 0.0
    %546 = vmatpush1.xpose.msra.mxu0 0.0
    %547 = vmatprep.subr.mxu0 0.0
    %548 = vmatpush1.xpose.msra.mxu0 0.0
    %549 = vmatprep.subr.mxu0 0.0
    %550 = vmatpush1.xpose.msra.mxu0 0.0
    %551 = vmatprep.subr.mxu0 0.0
    %552 = vmatpush1.xpose.msra.mxu0 0.0
    %553 = vmatprep.subr.mxu0 0.0
    %554 = vmatpush1.xpose.msra.mxu0 0.0
    %555 = vmatprep.subr.mxu0 0.0
    %556 = vmatpush1.xpose.msra.mxu0 0.0
    %557 = vmatprep.subr.mxu0 0.0
    %558 = vmatpush1.xpose.msra.mxu0 0.0
    %559 = vmatprep.subr.mxu0 0.0
    %560 = vmatpush1.xpose.msra.mxu0 0.0
    %561 = vmatprep.subr.mxu0 0.0
    %562 = vmatpush1.xpose.msra.mxu0 0.0
    %563 = vmatprep.subr.mxu0 0.0
    %564 = vmatpush1.xpose.msra.mxu0 0.0
    %565 = vmatprep.subr.mxu0 0.0
    %566 = vmatpush1.xpose.msra.mxu0 0.0
    %567 = vmatprep.subr.mxu0 0.0
    %568 = vmatpush1.xpose.msra.mxu0 0.0
    %569 = vmatprep.subr.mxu0 0.0
    %570 = vmatpush1.xpose.msra.mxu0 0.0
    %571 = vmatprep.subr.mxu0 0.0
    %572 = vmatpush1.xpose.msra.mxu0 0.0
    %573 = vmatprep.subr.mxu0 0.0
    %574 = vmatpush1.xpose.msra.mxu0 0.0
    %575 = vmatprep.subr.mxu0 0.0
    %576 = vmatpush1.xpose.msra.mxu0 0.0
    %577 = vmatprep.subr.mxu0 0.0
    %578 = vmatpush1.xpose.msra.mxu0 0.0
    %579 = vmatprep.subr.mxu0 0.0
    %580 = vmatpush1.xpose.msra.mxu0 0.0
    %581 = vmatprep.subr.mxu0 0.0
    %582 = vmatpush1.xpose.msra.mxu0 0.0
    %583 = vmatprep.subr.mxu0 0.0
    %584 = vmatpush1.xpose.msra.mxu0 0.0
    %585 = vmatprep.subr.mxu0 0.0
    %586 = vmatpush1.xpose.msra.mxu0 0.0
    %587 = vmatprep.subr.mxu0 0.0
    %588 = vmatpush1.xpose.msra.mxu0 0.0
    %589 = vmatprep.subr.mxu0 0.0
    %590 = vmatpush1.xpose.msra.mxu0 0.0
    %591 = vmatprep.subr.mxu0 0.0
    %592 = vmatpush1.xpose.msra.mxu0 0.0
    %593 = vmatprep.subr.mxu0 0.0
    %594 = vmatpush1.xpose.msra.mxu0 0.0
    %595 = vmatprep.subr.mxu0 0.0
    %596 = vmatpush1.xpose.msra.mxu0 0.0
    %597 = vmatprep.mubr.f32.mxu0 0.0
    %598 = vmatmul.mubr.f32.gmra.mrb[0].mxu0 %v531
    %v599 = vpop.f32.mrb[0].mxu0
    %v600 = vadd.f32 0.0, %v599
    %v601 = vpop.f32.mrb[0].mxu0
    %602 = vdwg.mxu0
    %v604 = vsel %vm35, %v157, 0
    %606 = vmatprep.subr.mxu0 0.0
    %607 = vmatpush1.xpose.msra.mxu0 %v55
    %608 = vmatprep.subr.mxu0 0.0
    %609 = vmatpush1.xpose.msra.mxu0 0.0
    %610 = vmatprep.subr.mxu0 0.0
    %611 = vmatpush1.xpose.msra.mxu0 0.0
    %612 = vmatprep.subr.mxu0 0.0
    %613 = vmatpush1.xpose.msra.mxu0 0.0
    %614 = vmatprep.subr.mxu0 0.0
    %615 = vmatpush1.xpose.msra.mxu0 0.0
    %616 = vmatprep.subr.mxu0 0.0
    %617 = vmatpush1.xpose.msra.mxu0 0.0
    %618 = vmatprep.subr.mxu0 0.0
    %619 = vmatpush1.xpose.msra.mxu0 0.0
    %620 = vmatprep.subr.mxu0 0.0
    %621 = vmatpush1.xpose.msra.mxu0 0.0
    %622 = vmatprep.subr.mxu0 0.0
    %623 = vmatpush1.xpose.msra.mxu0 0.0
    %624 = vmatprep.subr.mxu0 0.0
    %625 = vmatpush1.xpose.msra.mxu0 0.0
    %626 = vmatprep.subr.mxu0 0.0
    %627 = vmatpush1.xpose.msra.mxu0 0.0
    %628 = vmatprep.subr.mxu0 0.0
    %629 = vmatpush1.xpose.msra.mxu0 0.0
    %630 = vmatprep.subr.mxu0 0.0
    %631 = vmatpush1.xpose.msra.mxu0 0.0
    %632 = vmatprep.subr.mxu0 0.0
    %633 = vmatpush1.xpose.msra.mxu0 0.0
    %634 = vmatprep.subr.mxu0 0.0
    %635 = vmatpush1.xpose.msra.mxu0 0.0
    %636 = vmatprep.subr.mxu0 0.0
    %637 = vmatpush1.xpose.msra.mxu0 0.0
    %638 = vmatprep.subr.mxu0 0.0
    %639 = vmatpush1.xpose.msra.mxu0 0.0
    %640 = vmatprep.subr.mxu0 0.0
    %641 = vmatpush1.xpose.msra.mxu0 0.0
    %642 = vmatprep.subr.mxu0 0.0
    %643 = vmatpush1.xpose.msra.mxu0 0.0
    %644 = vmatprep.subr.mxu0 0.0
    %645 = vmatpush1.xpose.msra.mxu0 0.0
    %646 = vmatprep.subr.mxu0 0.0
    %647 = vmatpush1.xpose.msra.mxu0 0.0
    %648 = vmatprep.subr.mxu0 0.0
    %649 = vmatpush1.xpose.msra.mxu0 0.0
    %650 = vmatprep.subr.mxu0 0.0
    %651 = vmatpush1.xpose.msra.mxu0 0.0
    %652 = vmatprep.subr.mxu0 0.0
    %653 = vmatpush1.xpose.msra.mxu0 0.0
    %654 = vmatprep.subr.mxu0 0.0
    %655 = vmatpush1.xpose.msra.mxu0 0.0
    %656 = vmatprep.subr.mxu0 0.0
    %657 = vmatpush1.xpose.msra.mxu0 0.0
    %658 = vmatprep.subr.mxu0 0.0
    %659 = vmatpush1.xpose.msra.mxu0 0.0
    %660 = vmatprep.subr.mxu0 0.0
    %661 = vmatpush1.xpose.msra.mxu0 0.0
    %662 = vmatprep.subr.mxu0 0.0
    %663 = vmatpush1.xpose.msra.mxu0 0.0
    %664 = vmatprep.subr.mxu0 0.0
    %665 = vmatpush1.xpose.msra.mxu0 0.0
    %666 = vmatprep.subr.mxu0 0.0
    %667 = vmatpush1.xpose.msra.mxu0 0.0
    %668 = vmatprep.subr.mxu0 0.0
    %669 = vmatpush1.xpose.msra.mxu0 0.0
    %670 = vmatprep.mubr.f32.mxu0 0.0
    %671 = vmatmul.mubr.f32.gmra.mrb[0].mxu0 %v604
    %v672 = vpop.f32.mrb[0].mxu0
    %v673 = vadd.f32 0.0, %v672
    %v674 = vpop.f32.mrb[0].mxu0
    %675 = vdwg.mxu0
    %v677 = vsel %vm35, %v162, 0
    %679 = vmatprep.subr.mxu0 0.0
    %680 = vmatpush1.xpose.msra.mxu0 %v58
    %681 = vmatprep.subr.mxu0 0.0
    %682 = vmatpush1.xpose.msra.mxu0 0.0
    %683 = vmatprep.subr.mxu0 0.0
    %684 = vmatpush1.xpose.msra.mxu0 0.0
    %685 = vmatprep.subr.mxu0 0.0
    %686 = vmatpush1.xpose.msra.mxu0 0.0
    %687 = vmatprep.subr.mxu0 0.0
    %688 = vmatpush1.xpose.msra.mxu0 0.0
    %689 = vmatprep.subr.mxu0 0.0
    %690 = vmatpush1.xpose.msra.mxu0 0.0
    %691 = vmatprep.subr.mxu0 0.0
    %692 = vmatpush1.xpose.msra.mxu0 0.0
    %693 = vmatprep.subr.mxu0 0.0
    %694 = vmatpush1.xpose.msra.mxu0 0.0
    %695 = vmatprep.subr.mxu0 0.0
    %696 = vmatpush1.xpose.msra.mxu0 0.0
    %697 = vmatprep.subr.mxu0 0.0
    %698 = vmatpush1.xpose.msra.mxu0 0.0
    %699 = vmatprep.subr.mxu0 0.0
    %700 = vmatpush1.xpose.msra.mxu0 0.0
    %701 = vmatprep.subr.mxu0 0.0
    %702 = vmatpush1.xpose.msra.mxu0 0.0
    %703 = vmatprep.subr.mxu0 0.0
    %704 = vmatpush1.xpose.msra.mxu0 0.0
    %705 = vmatprep.subr.mxu0 0.0
    %706 = vmatpush1.xpose.msra.mxu0 0.0
    %707 = vmatprep.subr.mxu0 0.0
    %708 = vmatpush1.xpose.msra.mxu0 0.0
    %709 = vmatprep.subr.mxu0 0.0
    %710 = vmatpush1.xpose.msra.mxu0 0.0
    %711 = vmatprep.subr.mxu0 0.0
    %712 = vmatpush1.xpose.msra.mxu0 0.0
    %713 = vmatprep.subr.mxu0 0.0
    %714 = vmatpush1.xpose.msra.mxu0 0.0
    %715 = vmatprep.subr.mxu0 0.0
    %716 = vmatpush1.xpose.msra.mxu0 0.0
    %717 = vmatprep.subr.mxu0 0.0
    %718 = vmatpush1.xpose.msra.mxu0 0.0
    %719 = vmatprep.subr.mxu0 0.0
    %720 = vmatpush1.xpose.msra.mxu0 0.0
    %721 = vmatprep.subr.mxu0 0.0
    %722 = vmatpush1.xpose.msra.mxu0 0.0
    %723 = vmatprep.subr.mxu0 0.0
    %724 = vmatpush1.xpose.msra.mxu0 0.0
    %725 = vmatprep.subr.mxu0 0.0
    %726 = vmatpush1.xpose.msra.mxu0 0.0
    %727 = vmatprep.subr.mxu0 0.0
    %728 = vmatpush1.xpose.msra.mxu0 0.0
    %729 = vmatprep.subr.mxu0 0.0
    %730 = vmatpush1.xpose.msra.mxu0 0.0
    %731 = vmatprep.subr.mxu0 0.0
    %732 = vmatpush1.xpose.msra.mxu0 0.0
    %733 = vmatprep.subr.mxu0 0.0
    %734 = vmatpush1.xpose.msra.mxu0 0.0
    %735 = vmatprep.subr.mxu0 0.0
    %736 = vmatpush1.xpose.msra.mxu0 0.0
    %737 = vmatprep.subr.mxu0 0.0
    %738 = vmatpush1.xpose.msra.mxu0 0.0
    %739 = vmatprep.subr.mxu0 0.0
    %740 = vmatpush1.xpose.msra.mxu0 0.0
    %741 = vmatprep.subr.mxu0 0.0
    %742 = vmatpush1.xpose.msra.mxu0 0.0
    %743 = vmatprep.mubr.f32.mxu0 0.0
    %744 = vmatmul.mubr.f32.gmra.mrb[0].mxu0 %v677
    %v745 = vpop.f32.mrb[0].mxu0
    %v746 = vadd.f32 0.0, %v745
    %v747 = vpop.f32.mrb[0].mxu0
    %748 = vdwg.mxu0
    %vm749 = vcmask 64512
    %v750 = vsel %vm749, %v235, -inf
    %751 = vmax.xlane.f32.xlu0 %v750
    %v752 = vpop.xlane.xlu0 %751
    %v753 = vsel %vm749, %v308, -inf
    %754 = vmax.xlane.f32.xlu0 %v753
    %v755 = vpop.xlane.xlu0 %754
    %v756 = vsel %vm749, %v381, -inf
    %757 = vmax.xlane.f32.xlu0 %v756
    %v758 = vpop.xlane.xlu0 %757
    %v759 = vsel %vm749, %v454, -inf
    %760 = vmax.xlane.f32.xlu0 %v759
    %v761 = vpop.xlane.xlu0 %760
    %v762 = vsel %vm749, %v527, -inf
    %763 = vmax.xlane.f32.xlu0 %v762
    %v764 = vpop.xlane.xlu0 %763
    %v765 = vsel %vm749, %v600, -inf
    %766 = vmax.xlane.f32.xlu0 %v765
    %v767 = vpop.xlane.xlu0 %766
    %v768 = vsel %vm749, %v673, -inf
    %769 = vmax.xlane.f32.xlu0 %v768
    %v770 = vpop.xlane.xlu0 %769
    %v771 = vsel %vm749, %v746, -inf
    %772 = vmax.xlane.f32.xlu0 %v771
    %v773 = vpop.xlane.xlu0 %772
    %v774 = vsub.f32 %v235, %v752
    %v775 = vsub.f32 %v308, %v755
    %v776 = vsub.f32 %v381, %v758
    %v777 = vsub.f32 %v454, %v761
    %v778 = vsub.f32 %v527, %v764
    %v779 = vsub.f32 %v600, %v767
    %v780 = vsub.f32 %v673, %v770
    %v781 = vsub.f32 %v746, %v773
    %v782 = vmul.f32 %v774, 1.442695
    %v783 = vpow.pop %v782
    %v784 = vmul.f32 %v775, 1.442695
    %v785 = vpow.pop %v784
    %v786 = vmul.f32 %v776, 1.442695
    %v787 = vpow.pop %v786
    %v788 = vmul.f32 %v777, 1.442695
    %v789 = vpow.pop %v788
    %v790 = vmul.f32 %v778, 1.442695
    %v791 = vpow.pop %v790
    %v792 = vmul.f32 %v779, 1.442695
    %v793 = vpow.pop %v792
    %v794 = vmul.f32 %v780, 1.442695
    %v795 = vpow.pop %v794
    %v796 = vmul.f32 %v781, 1.442695
    %v797 = vpow.pop %v796
    %v798 = vsel %vm749, %v783, 0.0
    %799 = vadd.xlane.f32.xlu0 %v798
    %v800 = vpop.xlane.xlu0 %799
    %v801 = vsel %vm749, %v785, 0.0
    %802 = vadd.xlane.f32.xlu0 %v801
    %v803 = vpop.xlane.xlu0 %802
    %v804 = vsel %vm749, %v787, 0.0
    %805 = vadd.xlane.f32.xlu0 %v804
    %v806 = vpop.xlane.xlu0 %805
    %v807 = vsel %vm749, %v789, 0.0
    %808 = vadd.xlane.f32.xlu0 %v807
    %v809 = vpop.xlane.xlu0 %808
    %v810 = vsel %vm749, %v791, 0.0
    %811 = vadd.xlane.f32.xlu0 %v810
    %v812 = vpop.xlane.xlu0 %811
    %v813 = vsel %vm749, %v793, 0.0
    %814 = vadd.xlane.f32.xlu0 %v813
    %v815 = vpop.xlane.xlu0 %814
    %v816 = vsel %vm749, %v795, 0.0
    %817 = vadd.xlane.f32.xlu0 %v816
    %v818 = vpop.xlane.xlu0 %817
    %v819 = vsel %vm749, %v797, 0.0
    %820 = vadd.xlane.f32.xlu0 %v819
    %v821 = vpop.xlane.xlu0 %820
    %v822 = vrcp.pop %v800
    %v823 = vrcp.pop %v803
    %v824 = vrcp.pop %v806
    %v825 = vrcp.pop %v809
    %v826 = vrcp.pop %v812
    %v827 = vrcp.pop %v815
    %v828 = vrcp.pop %v818
    %v829 = vrcp.pop %v821
    %v830 = vmul.f32 %v783, %v822
    %v831 = vmul.f32 %v785, %v823
    %v832 = vmul.f32 %v787, %v824
    %v833 = vmul.f32 %v789, %v825
    %v834 = vmul.f32 %v791, %v826
    %v835 = vmul.f32 %v793, %v827
    %v836 = vmul.f32 %v795, %v828
    %v837 = vmul.f32 %v797, %v829
    %v839 = vsel %vm749, %v830, 0
    %841 = vmatprep.subr.mxu0 0.0
    %842 = vmatpush1.msra.mxu0 %v15
    %843 = vmatprep.subr.mxu0 0.0
    %844 = vmatpush1.msra.mxu0 0.0
    %845 = vmatprep.subr.mxu0 0.0
    %846 = vmatpush1.msra.mxu0 0.0
    %847 = vmatprep.subr.mxu0 0.0
    %848 = vmatpush1.msra.mxu0 0.0
    %849 = vmatprep.subr.mxu0 0.0
    %850 = vmatpush1.msra.mxu0 0.0
    %851 = vmatprep.subr.mxu0 0.0
    %852 = vmatpush1.msra.mxu0 0.0
    %853 = vmatprep.subr.mxu0 0.0
    %854 = vmatpush1.msra.mxu0 0.0
    %855 = vmatprep.subr.mxu0 0.0
    %856 = vmatpush1.msra.mxu0 0.0
    %857 = vmatprep.subr.mxu0 0.0
    %858 = vmatpush1.msra.mxu0 0.0
    %859 = vmatprep.subr.mxu0 0.0
    %860 = vmatpush1.msra.mxu0 0.0
    %861 = vmatprep.subr.mxu0 0.0
    %862 = vmatpush1.msra.mxu0 0.0
    %863 = vmatprep.subr.mxu0 0.0
    %864 = vmatpush1.msra.mxu0 0.0
    %865 = vmatprep.subr.mxu0 0.0
    %866 = vmatpush1.msra.mxu0 0.0
    %867 = vmatprep.subr.mxu0 0.0
    %868 = vmatpush1.msra.mxu0 0.0
    %869 = vmatprep.subr.mxu0 0.0
    %870 = vmatpush1.msra.mxu0 0.0
    %871 = vmatprep.subr.mxu0 0.0
    %872 = vmatpush1.msra.mxu0 0.0
    %873 = vmatprep.subr.mxu0 0.0
    %874 = vmatpush1.msra.mxu0 0.0
    %875 = vmatprep.subr.mxu0 0.0
    %876 = vmatpush1.msra.mxu0 0.0
    %877 = vmatprep.subr.mxu0 0.0
    %878 = vmatpush1.msra.mxu0 0.0
    %879 = vmatprep.subr.mxu0 0.0
    %880 = vmatpush1.msra.mxu0 0.0
    %881 = vmatprep.subr.mxu0 0.0
    %882 = vmatpush1.msra.mxu0 0.0
    %883 = vmatprep.subr.mxu0 0.0
    %884 = vmatpush1.msra.mxu0 0.0
    %885 = vmatprep.subr.mxu0 0.0
    %886 = vmatpush1.msra.mxu0 0.0
    %887 = vmatprep.subr.mxu0 0.0
    %888 = vmatpush1.msra.mxu0 0.0
    %889 = vmatprep.subr.mxu0 0.0
    %890 = vmatpush1.msra.mxu0 0.0
    %891 = vmatprep.subr.mxu0 0.0
    %892 = vmatpush1.msra.mxu0 0.0
    %893 = vmatprep.subr.mxu0 0.0
    %894 = vmatpush1.msra.mxu0 0.0
    %895 = vmatprep.subr.mxu0 0.0
    %896 = vmatpush1.msra.mxu0 0.0
    %897 = vmatprep.subr.mxu0 0.0
    %898 = vmatpush1.msra.mxu0 0.0
    %899 = vmatprep.subr.mxu0 0.0
    %900 = vmatpush1.msra.mxu0 0.0
    %901 = vmatprep.subr.mxu0 0.0
    %902 = vmatpush1.msra.mxu0 0.0
    %903 = vmatprep.subr.mxu0 0.0
    %904 = vmatpush1.msra.mxu0 0.0
    %905 = vmatprep.mubr.f32.mxu0 0.0
    %906 = vmatmul.mubr.f32.gmra.mrb[0].mxu0 %v839
    %v907 = vpop.f32.mrb[0].mxu0
    %v908 = vadd.f32 0.0, %v907
    %v909 = vpop.f32.mrb[0].mxu0
    %910 = vdwg.mxu0
    %v912 = vsel %vm749, %v831, 0
    %914 = vmatprep.subr.mxu0 0.0
    %915 = vmatpush1.msra.mxu0 %v16
    %916 = vmatprep.subr.mxu0 0.0
    %917 = vmatpush1.msra.mxu0 0.0
    %918 = vmatprep.subr.mxu0 0.0
    %919 = vmatpush1.msra.mxu0 0.0
    %920 = vmatprep.subr.mxu0 0.0
    %921 = vmatpush1.msra.mxu0 0.0
    %922 = vmatprep.subr.mxu0 0.0
    %923 = vmatpush1.msra.mxu0 0.0
    %924 = vmatprep.subr.mxu0 0.0
    %925 = vmatpush1.msra.mxu0 0.0
    %926 = vmatprep.subr.mxu0 0.0
    %927 = vmatpush1.msra.mxu0 0.0
    %928 = vmatprep.subr.mxu0 0.0
    %929 = vmatpush1.msra.mxu0 0.0
    %930 = vmatprep.subr.mxu0 0.0
    %931 = vmatpush1.msra.mxu0 0.0
    %932 = vmatprep.subr.mxu0 0.0
    %933 = vmatpush1.msra.mxu0 0.0
    %934 = vmatprep.subr.mxu0 0.0
    %935 = vmatpush1.msra.mxu0 0.0
    %936 = vmatprep.subr.mxu0 0.0
    %937 = vmatpush1.msra.mxu0 0.0
    %938 = vmatprep.subr.mxu0 0.0
    %939 = vmatpush1.msra.mxu0 0.0
    %940 = vmatprep.subr.mxu0 0.0
    %941 = vmatpush1.msra.mxu0 0.0
    %942 = vmatprep.subr.mxu0 0.0
    %943 = vmatpush1.msra.mxu0 0.0
    %944 = vmatprep.subr.mxu0 0.0
    %945 = vmatpush1.msra.mxu0 0.0
    %946 = vmatprep.subr.mxu0 0.0
    %947 = vmatpush1.msra.mxu0 0.0
    %948 = vmatprep.subr.mxu0 0.0
    %949 = vmatpush1.msra.mxu0 0.0
    %950 = vmatprep.subr.mxu0 0.0
    %951 = vmatpush1.msra.mxu0 0.0
    %952 = vmatprep.subr.mxu0 0.0
    %953 = vmatpush1.msra.mxu0 0.0
    %954 = vmatprep.subr.mxu0 0.0
    %955 = vmatpush1.msra.mxu0 0.0
    %956 = vmatprep.subr.mxu0 0.0
    %957 = vmatpush1.msra.mxu0 0.0
    %958 = vmatprep.subr.mxu0 0.0
    %959 = vmatpush1.msra.mxu0 0.0
    %960 = vmatprep.subr.mxu0 0.0
    %961 = vmatpush1.msra.mxu0 0.0
    %962 = vmatprep.subr.mxu0 0.0
    %963 = vmatpush1.msra.mxu0 0.0
    %964 = vmatprep.subr.mxu0 0.0
    %965 = vmatpush1.msra.mxu0 0.0
    %966 = vmatprep.subr.mxu0 0.0
    %967 = vmatpush1.msra.mxu0 0.0
    %968 = vmatprep.subr.mxu0 0.0
    %969 = vmatpush1.msra.mxu0 0.0
    %970 = vmatprep.subr.mxu0 0.0
    %971 = vmatpush1.msra.mxu0 0.0
    %972 = vmatprep.subr.mxu0 0.0
    %973 = vmatpush1.msra.mxu0 0.0
    %974 = vmatprep.subr.mxu0 0.0
    %975 = vmatpush1.msra.mxu0 0.0
    %976 = vmatprep.subr.mxu0 0.0
    %977 = vmatpush1.msra.mxu0 0.0
    %978 = vmatprep.mubr.f32.mxu0 0.0
    %979 = vmatmul.mubr.f32.gmra.mrb[0].mxu0 %v912
    %v980 = vpop.f32.mrb[0].mxu0
    %v981 = vadd.f32 0.0, %v980
    %v982 = vpop.f32.mrb[0].mxu0
    %983 = vdwg.mxu0
    %v985 = vsel %vm749, %v832, 0
    %987 = vmatprep.subr.mxu0 0.0
    %988 = vmatpush1.msra.mxu0 %v17
    %989 = vmatprep.subr.mxu0 0.0
    %990 = vmatpush1.msra.mxu0 0.0
    %991 = vmatprep.subr.mxu0 0.0
    %992 = vmatpush1.msra.mxu0 0.0
    %993 = vmatprep.subr.mxu0 0.0
    %994 = vmatpush1.msra.mxu0 0.0
    %995 = vmatprep.subr.mxu0 0.0
    %996 = vmatpush1.msra.mxu0 0.0
    %997 = vmatprep.subr.mxu0 0.0
    %998 = vmatpush1.msra.mxu0 0.0
    %999 = vmatprep.subr.mxu0 0.0
    %1000 = vmatpush1.msra.mxu0 0.0
    %1001 = vmatprep.subr.mxu0 0.0
    %1002 = vmatpush1.msra.mxu0 0.0
    %1003 = vmatprep.subr.mxu0 0.0
    %1004 = vmatpush1.msra.mxu0 0.0
    %1005 = vmatprep.subr.mxu0 0.0
    %1006 = vmatpush1.msra.mxu0 0.0
    %1007 = vmatprep.subr.mxu0 0.0
    %1008 = vmatpush1.msra.mxu0 0.0
    %1009 = vmatprep.subr.mxu0 0.0
    %1010 = vmatpush1.msra.mxu0 0.0
    %1011 = vmatprep.subr.mxu0 0.0
    %1012 = vmatpush1.msra.mxu0 0.0
    %1013 = vmatprep.subr.mxu0 0.0
    %1014 = vmatpush1.msra.mxu0 0.0
    %1015 = vmatprep.subr.mxu0 0.0
    %1016 = vmatpush1.msra.mxu0 0.0
    %1017 = vmatprep.subr.mxu0 0.0
    %1018 = vmatpush1.msra.mxu0 0.0
    %1019 = vmatprep.subr.mxu0 0.0
    %1020 = vmatpush1.msra.mxu0 0.0
    %1021 = vmatprep.subr.mxu0 0.0
    %1022 = vmatpush1.msra.mxu0 0.0
    %1023 = vmatprep.subr.mxu0 0.0
    %1024 = vmatpush1.msra.mxu0 0.0
    %1025 = vmatprep.subr.mxu0 0.0
    %1026 = vmatpush1.msra.mxu0 0.0
    %1027 = vmatprep.subr.mxu0 0.0
    %1028 = vmatpush1.msra.mxu0 0.0
    %1029 = vmatprep.subr.mxu0 0.0
    %1030 = vmatpush1.msra.mxu0 0.0
    %1031 = vmatprep.subr.mxu0 0.0
    %1032 = vmatpush1.msra.mxu0 0.0
    %1033 = vmatprep.subr.mxu0 0.0
    %1034 = vmatpush1.msra.mxu0 0.0
    %1035 = vmatprep.subr.mxu0 0.0
    %1036 = vmatpush1.msra.mxu0 0.0
    %1037 = vmatprep.subr.mxu0 0.0
    %1038 = vmatpush1.msra.mxu0 0.0
    %1039 = vmatprep.subr.mxu0 0.0
    %1040 = vmatpush1.msra.mxu0 0.0
    %1041 = vmatprep.subr.mxu0 0.0
    %1042 = vmatpush1.msra.mxu0 0.0
    %1043 = vmatprep.subr.mxu0 0.0
    %1044 = vmatpush1.msra.mxu0 0.0
    %1045 = vmatprep.subr.mxu0 0.0
    %1046 = vmatpush1.msra.mxu0 0.0
    %1047 = vmatprep.subr.mxu0 0.0
    %1048 = vmatpush1.msra.mxu0 0.0
    %1049 = vmatprep.subr.mxu0 0.0
    %1050 = vmatpush1.msra.mxu0 0.0
    %1051 = vmatprep.mubr.f32.mxu0 0.0
    %1052 = vmatmul.mubr.f32.gmra.mrb[0].mxu0 %v985
    %v1053 = vpop.f32.mrb[0].mxu0
    %v1054 = vadd.f32 0.0, %v1053
    %v1055 = vpop.f32.mrb[0].mxu0
    %1056 = vdwg.mxu0
    %v1058 = vsel %vm749, %v833, 0
    %1060 = vmatprep.subr.mxu0 0.0
    %1061 = vmatpush1.msra.mxu0 %v18
    %1062 = vmatprep.subr.mxu0 0.0
    %1063 = vmatpush1.msra.mxu0 0.0
    %1064 = vmatprep.subr.mxu0 0.0
    %1065 = vmatpush1.msra.mxu0 0.0
    %1066 = vmatprep.subr.mxu0 0.0
    %1067 = vmatpush1.msra.mxu0 0.0
    %1068 = vmatprep.subr.mxu0 0.0
    %1069 = vmatpush1.msra.mxu0 0.0
    %1070 = vmatprep.subr.mxu0 0.0
    %1071 = vmatpush1.msra.mxu0 0.0
    %1072 = vmatprep.subr.mxu0 0.0
    %1073 = vmatpush1.msra.mxu0 0.0
    %1074 = vmatprep.subr.mxu0 0.0
    %1075 = vmatpush1.msra.mxu0 0.0
    %1076 = vmatprep.subr.mxu0 0.0
    %1077 = vmatpush1.msra.mxu0 0.0
    %1078 = vmatprep.subr.mxu0 0.0
    %1079 = vmatpush1.msra.mxu0 0.0
    %1080 = vmatprep.subr.mxu0 0.0
    %1081 = vmatpush1.msra.mxu0 0.0
    %1082 = vmatprep.subr.mxu0 0.0
    %1083 = vmatpush1.msra.mxu0 0.0
    %1084 = vmatprep.subr.mxu0 0.0
    %1085 = vmatpush1.msra.mxu0 0.0
    %1086 = vmatprep.subr.mxu0 0.0
    %1087 = vmatpush1.msra.mxu0 0.0
    %1088 = vmatprep.subr.mxu0 0.0
    %1089 = vmatpush1.msra.mxu0 0.0
    %1090 = vmatprep.subr.mxu0 0.0
    %1091 = vmatpush1.msra.mxu0 0.0
    %1092 = vmatprep.subr.mxu0 0.0
    %1093 = vmatpush1.msra.mxu0 0.0
    %1094 = vmatprep.subr.mxu0 0.0
    %1095 = vmatpush1.msra.mxu0 0.0
    %1096 = vmatprep.subr.mxu0 0.0
    %1097 = vmatpush1.msra.mxu0 0.0
    %1098 = vmatprep.subr.mxu0 0.0
    %1099 = vmatpush1.msra.mxu0 0.0
    %1100 = vmatprep.subr.mxu0 0.0
    %1101 = vmatpush1.msra.mxu0 0.0
    %1102 = vmatprep.subr.mxu0 0.0
    %1103 = vmatpush1.msra.mxu0 0.0
    %1104 = vmatprep.subr.mxu0 0.0
    %1105 = vmatpush1.msra.mxu0 0.0
    %1106 = vmatprep.subr.mxu0 0.0
    %1107 = vmatpush1.msra.mxu0 0.0
    %1108 = vmatprep.subr.mxu0 0.0
    %1109 = vmatpush1.msra.mxu0 0.0
    %1110 = vmatprep.subr.mxu0 0.0
    %1111 = vmatpush1.msra.mxu0 0.0
    %1112 = vmatprep.subr.mxu0 0.0
    %1113 = vmatpush1.msra.mxu0 0.0
    %1114 = vmatprep.subr.mxu0 0.0
    %1115 = vmatpush1.msra.mxu0 0.0
    %1116 = vmatprep.subr.mxu0 0.0
    %1117 = vmatpush1.msra.mxu0 0.0
    %1118 = vmatprep.subr.mxu0 0.0
    %1119 = vmatpush1.msra.mxu0 0.0
    %1120 = vmatprep.subr.mxu0 0.0
    %1121 = vmatpush1.msra.mxu0 0.0
    %1122 = vmatprep.subr.mxu0 0.0
    %1123 = vmatpush1.msra.mxu0 0.0
    %1124 = vmatprep.mubr.f32.mxu0 0.0
    %1125 = vmatmul.mubr.f32.gmra.mrb[0].mxu0 %v1058
    %v1126 = vpop.f32.mrb[0].mxu0
    %v1127 = vadd.f32 0.0, %v1126
    %v1128 = vpop.f32.mrb[0].mxu0
    %1129 = vdwg.mxu0
    %v1131 = vsel %vm749, %v834, 0
    %1133 = vmatprep.subr.mxu0 0.0
    %1134 = vmatpush1.msra.mxu0 %v19
    %1135 = vmatprep.subr.mxu0 0.0
    %1136 = vmatpush1.msra.mxu0 0.0
    %1137 = vmatprep.subr.mxu0 0.0
    %1138 = vmatpush1.msra.mxu0 0.0
    %1139 = vmatprep.subr.mxu0 0.0
    %1140 = vmatpush1.msra.mxu0 0.0
    %1141 = vmatprep.subr.mxu0 0.0
    %1142 = vmatpush1.msra.mxu0 0.0
    %1143 = vmatprep.subr.mxu0 0.0
    %1144 = vmatpush1.msra.mxu0 0.0
    %1145 = vmatprep.subr.mxu0 0.0
    %1146 = vmatpush1.msra.mxu0 0.0
    %1147 = vmatprep.subr.mxu0 0.0
    %1148 = vmatpush1.msra.mxu0 0.0
    %1149 = vmatprep.subr.mxu0 0.0
    %1150 = vmatpush1.msra.mxu0 0.0
    %1151 = vmatprep.subr.mxu0 0.0
    %1152 = vmatpush1.msra.mxu0 0.0
    %1153 = vmatprep.subr.mxu0 0.0
    %1154 = vmatpush1.msra.mxu0 0.0
    %1155 = vmatprep.subr.mxu0 0.0
    %1156 = vmatpush1.msra.mxu0 0.0
    %1157 = vmatprep.subr.mxu0 0.0
    %1158 = vmatpush1.msra.mxu0 0.0
    %1159 = vmatprep.subr.mxu0 0.0
    %1160 = vmatpush1.msra.mxu0 0.0
    %1161 = vmatprep.subr.mxu0 0.0
    %1162 = vmatpush1.msra.mxu0 0.0
    %1163 = vmatprep.subr.mxu0 0.0
    %1164 = vmatpush1.msra.mxu0 0.0
    %1165 = vmatprep.subr.mxu0 0.0
    %1166 = vmatpush1.msra.mxu0 0.0
    %1167 = vmatprep.subr.mxu0 0.0
    %1168 = vmatpush1.msra.mxu0 0.0
    %1169 = vmatprep.subr.mxu0 0.0
    %1170 = vmatpush1.msra.mxu0 0.0
    %1171 = vmatprep.subr.mxu0 0.0
    %1172 = vmatpush1.msra.mxu0 0.0
    %1173 = vmatprep.subr.mxu0 0.0
    %1174 = vmatpush1.msra.mxu0 0.0
    %1175 = vmatprep.subr.mxu0 0.0
    %1176 = vmatpush1.msra.mxu0 0.0
    %1177 = vmatprep.subr.mxu0 0.0
    %1178 = vmatpush1.msra.mxu0 0.0
    %1179 = vmatprep.subr.mxu0 0.0
    %1180 = vmatpush1.msra.mxu0 0.0
    %1181 = vmatprep.subr.mxu0 0.0
    %1182 = vmatpush1.msra.mxu0 0.0
    %1183 = vmatprep.subr.mxu0 0.0
    %1184 = vmatpush1.msra.mxu0 0.0
    %1185 = vmatprep.subr.mxu0 0.0
    %1186 = vmatpush1.msra.mxu0 0.0
    %1187 = vmatprep.subr.mxu0 0.0
    %1188 = vmatpush1.msra.mxu0 0.0
    %1189 = vmatprep.subr.mxu0 0.0
    %1190 = vmatpush1.msra.mxu0 0.0
    %1191 = vmatprep.subr.mxu0 0.0
    %1192 = vmatpush1.msra.mxu0 0.0
    %1193 = vmatprep.subr.mxu0 0.0
    %1194 = vmatpush1.msra.mxu0 0.0
    %1195 = vmatprep.subr.mxu0 0.0
    %1196 = vmatpush1.msra.mxu0 0.0
    %1197 = vmatprep.mubr.f32.mxu0 0.0
    %1198 = vmatmul.mubr.f32.gmra.mrb[0].mxu0 %v1131
    %v1199 = vpop.f32.mrb[0].mxu0
    %v1200 = vadd.f32 0.0, %v1199
    %v1201 = vpop.f32.mrb[0].mxu0
    %1202 = vdwg.mxu0
    %v1204 = vsel %vm749, %v835, 0
    %1206 = vmatprep.subr.mxu0 0.0
    %1207 = vmatpush1.msra.mxu0 %v20
    %1208 = vmatprep.subr.mxu0 0.0
    %1209 = vmatpush1.msra.mxu0 0.0
    %1210 = vmatprep.subr.mxu0 0.0
    %1211 = vmatpush1.msra.mxu0 0.0
    %1212 = vmatprep.subr.mxu0 0.0
    %1213 = vmatpush1.msra.mxu0 0.0
    %1214 = vmatprep.subr.mxu0 0.0
    %1215 = vmatpush1.msra.mxu0 0.0
    %1216 = vmatprep.subr.mxu0 0.0
    %1217 = vmatpush1.msra.mxu0 0.0
    %1218 = vmatprep.subr.mxu0 0.0
    %1219 = vmatpush1.msra.mxu0 0.0
    %1220 = vmatprep.subr.mxu0 0.0
    %1221 = vmatpush1.msra.mxu0 0.0
    %1222 = vmatprep.subr.mxu0 0.0
    %1223 = vmatpush1.msra.mxu0 0.0
    %1224 = vmatprep.subr.mxu0 0.0
    %1225 = vmatpush1.msra.mxu0 0.0
    %1226 = vmatprep.subr.mxu0 0.0
    %1227 = vmatpush1.msra.mxu0 0.0
    %1228 = vmatprep.subr.mxu0 0.0
    %1229 = vmatpush1.msra.mxu0 0.0
    %1230 = vmatprep.subr.mxu0 0.0
    %1231 = vmatpush1.msra.mxu0 0.0
    %1232 = vmatprep.subr.mxu0 0.0
    %1233 = vmatpush1.msra.mxu0 0.0
    %1234 = vmatprep.subr.mxu0 0.0
    %1235 = vmatpush1.msra.mxu0 0.0
    %1236 = vmatprep.subr.mxu0 0.0
    %1237 = vmatpush1.msra.mxu0 0.0
    %1238 = vmatprep.subr.mxu0 0.0
    %1239 = vmatpush1.msra.mxu0 0.0
    %1240 = vmatprep.subr.mxu0 0.0
    %1241 = vmatpush1.msra.mxu0 0.0
    %1242 = vmatprep.subr.mxu0 0.0
    %1243 = vmatpush1.msra.mxu0 0.0
    %1244 = vmatprep.subr.mxu0 0.0
    %1245 = vmatpush1.msra.mxu0 0.0
    %1246 = vmatprep.subr.mxu0 0.0
    %1247 = vmatpush1.msra.mxu0 0.0
    %1248 = vmatprep.subr.mxu0 0.0
    %1249 = vmatpush1.msra.mxu0 0.0
    %1250 = vmatprep.subr.mxu0 0.0
    %1251 = vmatpush1.msra.mxu0 0.0
    %1252 = vmatprep.subr.mxu0 0.0
    %1253 = vmatpush1.msra.mxu0 0.0
    %1254 = vmatprep.subr.mxu0 0.0
    %1255 = vmatpush1.msra.mxu0 0.0
    %1256 = vmatprep.subr.mxu0 0.0
    %1257 = vmatpush1.msra.mxu0 0.0
    %1258 = vmatprep.subr.mxu0 0.0
    %1259 = vmatpush1.msra.mxu0 0.0
    %1260 = vmatprep.subr.mxu0 0.0
    %1261 = vmatpush1.msra.mxu0 0.0
    %1262 = vmatprep.subr.mxu0 0.0
    %1263 = vmatpush1.msra.mxu0 0.0
    %1264 = vmatprep.subr.mxu0 0.0
    %1265 = vmatpush1.msra.mxu0 0.0
    %1266 = vmatprep.subr.mxu0 0.0
    %1267 = vmatpush1.msra.mxu0 0.0
    %1268 = vmatprep.subr.mxu0 0.0
    %1269 = vmatpush1.msra.mxu0 0.0
    %1270 = vmatprep.mubr.f32.mxu0 0.0
    %1271 = vmatmul.mubr.f32.gmra.mrb[0].mxu0 %v1204
    %v1272 = vpop.f32.mrb[0].mxu0
    %v1273 = vadd.f32 0.0, %v1272
    %v1274 = vpop.f32.mrb[0].mxu0
    %1275 = vdwg.mxu0
    %v1277 = vsel %vm749, %v836, 0
    %1279 = vmatprep.subr.mxu0 0.0
    %1280 = vmatpush1.msra.mxu0 %v21
    %1281 = vmatprep.subr.mxu0 0.0
    %1282 = vmatpush1.msra.mxu0 0.0
    %1283 = vmatprep.subr.mxu0 0.0
    %1284 = vmatpush1.msra.mxu0 0.0
    %1285 = vmatprep.subr.mxu0 0.0
    %1286 = vmatpush1.msra.mxu0 0.0
    %1287 = vmatprep.subr.mxu0 0.0
    %1288 = vmatpush1.msra.mxu0 0.0
    %1289 = vmatprep.subr.mxu0 0.0
    %1290 = vmatpush1.msra.mxu0 0.0
    %1291 = vmatprep.subr.mxu0 0.0
    %1292 = vmatpush1.msra.mxu0 0.0
    %1293 = vmatprep.subr.mxu0 0.0
    %1294 = vmatpush1.msra.mxu0 0.0
    %1295 = vmatprep.subr.mxu0 0.0
    %1296 = vmatpush1.msra.mxu0 0.0
    %1297 = vmatprep.subr.mxu0 0.0
    %1298 = vmatpush1.msra.mxu0 0.0
    %1299 = vmatprep.subr.mxu0 0.0
    %1300 = vmatpush1.msra.mxu0 0.0
    %1301 = vmatprep.subr.mxu0 0.0
    %1302 = vmatpush1.msra.mxu0 0.0
    %1303 = vmatprep.subr.mxu0 0.0
    %1304 = vmatpush1.msra.mxu0 0.0
    %1305 = vmatprep.subr.mxu0 0.0
    %1306 = vmatpush1.msra.mxu0 0.0
    %1307 = vmatprep.subr.mxu0 0.0
    %1308 = vmatpush1.msra.mxu0 0.0
    %1309 = vmatprep.subr.mxu0 0.0
    %1310 = vmatpush1.msra.mxu0 0.0
    %1311 = vmatprep.subr.mxu0 0.0
    %1312 = vmatpush1.msra.mxu0 0.0
    %1313 = vmatprep.subr.mxu0 0.0
    %1314 = vmatpush1.msra.mxu0 0.0
    %1315 = vmatprep.subr.mxu0 0.0
    %1316 = vmatpush1.msra.mxu0 0.0
    %1317 = vmatprep.subr.mxu0 0.0
    %1318 = vmatpush1.msra.mxu0 0.0
    %1319 = vmatprep.subr.mxu0 0.0
    %1320 = vmatpush1.msra.mxu0 0.0
    %1321 = vmatprep.subr.mxu0 0.0
    %1322 = vmatpush1.msra.mxu0 0.0
    %1323 = vmatprep.subr.mxu0 0.0
    %1324 = vmatpush1.msra.mxu0 0.0
    %1325 = vmatprep.subr.mxu0 0.0
    %1326 = vmatpush1.msra.mxu0 0.0
    %1327 = vmatprep.subr.mxu0 0.0
    %1328 = vmatpush1.msra.mxu0 0.0
    %1329 = vmatprep.subr.mxu0 0.0
    %1330 = vmatpush1.msra.mxu0 0.0
    %1331 = vmatprep.subr.mxu0 0.0
    %1332 = vmatpush1.msra.mxu0 0.0
    %1333 = vmatprep.subr.mxu0 0.0
    %1334 = vmatpush1.msra.mxu0 0.0
    %1335 = vmatprep.subr.mxu0 0.0
    %1336 = vmatpush1.msra.mxu0 0.0
    %1337 = vmatprep.subr.mxu0 0.0
    %1338 = vmatpush1.msra.mxu0 0.0
    %1339 = vmatprep.subr.mxu0 0.0
    %1340 = vmatpush1.msra.mxu0 0.0
    %1341 = vmatprep.subr.mxu0 0.0
    %1342 = vmatpush1.msra.mxu0 0.0
    %1343 = vmatprep.mubr.f32.mxu0 0.0
    %1344 = vmatmul.mubr.f32.gmra.mrb[0].mxu0 %v1277
    %v1345 = vpop.f32.mrb[0].mxu0
    %v1346 = vadd.f32 0.0, %v1345
    %v1347 = vpop.f32.mrb[0].mxu0
    %1348 = vdwg.mxu0
    %v1350 = vsel %vm749, %v837, 0
    %1352 = vmatprep.subr.mxu0 0.0
    %1353 = vmatpush1.msra.mxu0 %v22
    %1354 = vmatprep.subr.mxu0 0.0
    %1355 = vmatpush1.msra.mxu0 0.0
    %1356 = vmatprep.subr.mxu0 0.0
    %1357 = vmatpush1.msra.mxu0 0.0
    %1358 = vmatprep.subr.mxu0 0.0
    %1359 = vmatpush1.msra.mxu0 0.0
    %1360 = vmatprep.subr.mxu0 0.0
    %1361 = vmatpush1.msra.mxu0 0.0
    %1362 = vmatprep.subr.mxu0 0.0
    %1363 = vmatpush1.msra.mxu0 0.0
    %1364 = vmatprep.subr.mxu0 0.0
    %1365 = vmatpush1.msra.mxu0 0.0
    %1366 = vmatprep.subr.mxu0 0.0
    %1367 = vmatpush1.msra.mxu0 0.0
    %1368 = vmatprep.subr.mxu0 0.0
    %1369 = vmatpush1.msra.mxu0 0.0
    %1370 = vmatprep.subr.mxu0 0.0
    %1371 = vmatpush1.msra.mxu0 0.0
    %1372 = vmatprep.subr.mxu0 0.0
    %1373 = vmatpush1.msra.mxu0 0.0
    %1374 = vmatprep.subr.mxu0 0.0
    %1375 = vmatpush1.msra.mxu0 0.0
    %1376 = vmatprep.subr.mxu0 0.0
    %1377 = vmatpush1.msra.mxu0 0.0
    %1378 = vmatprep.subr.mxu0 0.0
    %1379 = vmatpush1.msra.mxu0 0.0
    %1380 = vmatprep.subr.mxu0 0.0
    %1381 = vmatpush1.msra.mxu0 0.0
    %1382 = vmatprep.subr.mxu0 0.0
    %1383 = vmatpush1.msra.mxu0 0.0
    %1384 = vmatprep.subr.mxu0 0.0
    %1385 = vmatpush1.msra.mxu0 0.0
    %1386 = vmatprep.subr.mxu0 0.0
    %1387 = vmatpush1.msra.mxu0 0.0
    %1388 = vmatprep.subr.mxu0 0.0
    %1389 = vmatpush1.msra.mxu0 0.0
    %1390 = vmatprep.subr.mxu0 0.0
    %1391 = vmatpush1.msra.mxu0 0.0
    %1392 = vmatprep.subr.mxu0 0.0
    %1393 = vmatpush1.msra.mxu0 0.0
    %1394 = vmatprep.subr.mxu0 0.0
    %1395 = vmatpush1.msra.mxu0 0.0
    %1396 = vmatprep.subr.mxu0 0.0
    %1397 = vmatpush1.msra.mxu0 0.0
    %1398 = vmatprep.subr.mxu0 0.0
    %1399 = vmatpush1.msra.mxu0 0.0
    %1400 = vmatprep.subr.mxu0 0.0
    %1401 = vmatpush1.msra.mxu0 0.0
    %1402 = vmatprep.subr.mxu0 0.0
    %1403 = vmatpush1.msra.mxu0 0.0
    %1404 = vmatprep.subr.mxu0 0.0
    %1405 = vmatpush1.msra.mxu0 0.0
    %1406 = vmatprep.subr.mxu0 0.0
    %1407 = vmatpush1.msra.mxu0 0.0
    %1408 = vmatprep.subr.mxu0 0.0
    %1409 = vmatpush1.msra.mxu0 0.0
    %1410 = vmatprep.subr.mxu0 0.0
    %1411 = vmatpush1.msra.mxu0 0.0
    %1412 = vmatprep.subr.mxu0 0.0
    %1413 = vmatpush1.msra.mxu0 0.0
    %1414 = vmatprep.subr.mxu0 0.0
    %1415 = vmatpush1.msra.mxu0 0.0
    %1416 = vmatprep.mubr.f32.mxu0 0.0
    %1417 = vmatmul.mubr.f32.gmra.mrb[0].mxu0 %v1350
    %v1418 = vpop.f32.mrb[0].mxu0
    %v1419 = vadd.f32 0.0, %v1418
    %v1420 = vpop.f32.mrb[0].mxu0
    %1421 = vdwg.mxu0
    %1422 = vrot.lane.b32.xlu0 %v127, 32
    %v1423 = vpop.permute.xlu0 %1422
    %1424 = vrot.lane.b32.xlu0 %v132, 32
    %v1425 = vpop.permute.xlu0 %1424
    %1426 = vrot.lane.b32.xlu0 %v137, 32
    %v1427 = vpop.permute.xlu0 %1426
    %1428 = vrot.lane.b32.xlu0 %v142, 32
    %v1429 = vpop.permute.xlu0 %1428
    %1430 = vrot.lane.b32.xlu0 %v147, 32
    %v1431 = vpop.permute.xlu0 %1430
    %1432 = vrot.lane.b32.xlu0 %v152, 32
    %v1433 = vpop.permute.xlu0 %1432
    %1434 = vrot.lane.b32.xlu0 %v157, 32
    %v1435 = vpop.permute.xlu0 %1434
    %1436 = vrot.lane.b32.xlu0 %v162, 32
    %v1437 = vpop.permute.xlu0 %1436
    %v1446 = vsel %vm35, %v908, %v1423
    %v1447 = vsel %vm35, %v981, %v1425
    %v1448 = vsel %vm35, %v1054, %v1427
    %v1449 = vsel %vm35, %v1127, %v1429
    %v1450 = vsel %vm35, %v1200, %v1431
    %v1451 = vsel %vm35, %v1273, %v1433
    %v1452 = vsel %vm35, %v1346, %v1435
    %v1453 = vsel %vm35, %v1419, %v1437
    %vm1454 = vcmask 523264
    %v1456 = vsel %vm1454, %v1446, 0
    %v1459 = vsel %vm1454, %v1447, 0
    %v1462 = vsel %vm1454, %v1448, 0
    %v1465 = vsel %vm1454, %v1449, 0
    %v1468 = vsel %vm1454, %v1450, 0
    %v1471 = vsel %vm1454, %v1451, 0
    %v1474 = vsel %vm1454, %v1452, 0
    %v1477 = vsel %vm1454, %v1453, 0
    %1479 = vmatprep.subr.mxu0 0.0
    %1480 = vmatpush1.msra.mxu0 %v27
    %1481 = vmatprep.subr.mxu0 0.0
    %1482 = vmatpush1.msra.mxu0 %v28
    %1483 = vmatprep.subr.mxu0 0.0
    %1484 = vmatpush1.msra.mxu0 %v29
    %1485 = vmatprep.subr.mxu0 0.0
    %1486 = vmatpush1.msra.mxu0 %v30
    %1487 = vmatprep.subr.mxu0 0.0
    %1488 = vmatpush1.msra.mxu0 %v31
    %1489 = vmatprep.subr.mxu0 0.0
    %1490 = vmatpush1.msra.mxu0 %v32
    %1491 = vmatprep.subr.mxu0 0.0
    %1492 = vmatpush1.msra.mxu0 %v33
    %1493 = vmatprep.subr.mxu0 0.0
    %1494 = vmatpush1.msra.mxu0 %v34
    %1495 = vmatprep.subr.mxu0 0.0
    %1496 = vmatpush1.msra.mxu0 0.0
    %1497 = vmatprep.subr.mxu0 0.0
    %1498 = vmatpush1.msra.mxu0 0.0
    %1499 = vmatprep.subr.mxu0 0.0
    %1500 = vmatpush1.msra.mxu0 0.0
    %1501 = vmatprep.subr.mxu0 0.0
    %1502 = vmatpush1.msra.mxu0 0.0
    %1503 = vmatprep.subr.mxu0 0.0
    %1504 = vmatpush1.msra.mxu0 0.0
    %1505 = vmatprep.subr.mxu0 0.0
    %1506 = vmatpush1.msra.mxu0 0.0
    %1507 = vmatprep.subr.mxu0 0.0
    %1508 = vmatpush1.msra.mxu0 0.0
    %1509 = vmatprep.subr.mxu0 0.0
    %1510 = vmatpush1.msra.mxu0 0.0
    %1511 = vmatprep.subr.mxu0 0.0
    %1512 = vmatpush1.msra.mxu0 0.0
    %1513 = vmatprep.subr.mxu0 0.0
    %1514 = vmatpush1.msra.mxu0 0.0
    %1515 = vmatprep.subr.mxu0 0.0
    %1516 = vmatpush1.msra.mxu0 0.0
    %1517 = vmatprep.subr.mxu0 0.0
    %1518 = vmatpush1.msra.mxu0 0.0
    %1519 = vmatprep.subr.mxu0 0.0
    %1520 = vmatpush1.msra.mxu0 0.0
    %1521 = vmatprep.subr.mxu0 0.0
    %1522 = vmatpush1.msra.mxu0 0.0
    %1523 = vmatprep.subr.mxu0 0.0
    %1524 = vmatpush1.msra.mxu0 0.0
    %1525 = vmatprep.subr.mxu0 0.0
    %1526 = vmatpush1.msra.mxu0 0.0
    %1527 = vmatprep.subr.mxu0 0.0
    %1528 = vmatpush1.msra.mxu0 0.0
    %1529 = vmatprep.subr.mxu0 0.0
    %1530 = vmatpush1.msra.mxu0 0.0
    %1531 = vmatprep.subr.mxu0 0.0
    %1532 = vmatpush1.msra.mxu0 0.0
    %1533 = vmatprep.subr.mxu0 0.0
    %1534 = vmatpush1.msra.mxu0 0.0
    %1535 = vmatprep.subr.mxu0 0.0
    %1536 = vmatpush1.msra.mxu0 0.0
    %1537 = vmatprep.subr.mxu0 0.0
    %1538 = vmatpush1.msra.mxu0 0.0
    %1539 = vmatprep.subr.mxu0 0.0
    %1540 = vmatpush1.msra.mxu0 0.0
    %1541 = vmatprep.subr.mxu0 0.0
    %1542 = vmatpush1.msra.mxu0 0.0
    %1543 = vmatprep.mubr.f32.mxu0 0.0
    %1544 = vmatmul.mubr.f32.gmra.mrb[0].mxu0 %v1456
    %v1545 = vpop.f32.mrb[0].mxu0
    %v1546 = vadd.f32 0.0, %v1545
    %v1547 = vpop.f32.mrb[0].mxu0
    %1548 = vmatprep.mubr.f32.mxu0 0.0
    %1549 = vmatmul.mubr.f32.gmra.mrb[0].mxu0 %v1459
    %v1550 = vpop.f32.mrb[0].mxu0
    %v1551 = vadd.f32 0.0, %v1550
    %v1552 = vpop.f32.mrb[0].mxu0
    %1553 = vmatprep.mubr.f32.mxu0 0.0
    %1554 = vmatmul.mubr.f32.gmra.mrb[0].mxu0 %v1462
    %v1555 = vpop.f32.mrb[0].mxu0
    %v1556 = vadd.f32 0.0, %v1555
    %v1557 = vpop.f32.mrb[0].mxu0
    %1558 = vmatprep.mubr.f32.mxu0 0.0
    %1559 = vmatmul.mubr.f32.gmra.mrb[0].mxu0 %v1465
    %v1560 = vpop.f32.mrb[0].mxu0
    %v1561 = vadd.f32 0.0, %v1560
    %v1562 = vpop.f32.mrb[0].mxu0
    %1563 = vmatprep.mubr.f32.mxu0 0.0
    %1564 = vmatmul.mubr.f32.gmra.mrb[0].mxu0 %v1468
    %v1565 = vpop.f32.mrb[0].mxu0
    %v1566 = vadd.f32 0.0, %v1565
    %v1567 = vpop.f32.mrb[0].mxu0
    %1568 = vmatprep.mubr.f32.mxu0 0.0
    %1569 = vmatmul.mubr.f32.gmra.mrb[0].mxu0 %v1471
    %v1570 = vpop.f32.mrb[0].mxu0
    %v1571 = vadd.f32 0.0, %v1570
    %v1572 = vpop.f32.mrb[0].mxu0
    %1573 = vmatprep.mubr.f32.mxu0 0.0
    %1574 = vmatmul.mubr.f32.gmra.mrb[0].mxu0 %v1474
    %v1575 = vpop.f32.mrb[0].mxu0
    %v1576 = vadd.f32 0.0, %v1575
    %v1577 = vpop.f32.mrb[0].mxu0
    %1578 = vmatprep.mubr.f32.mxu0 0.0
    %1579 = vmatmul.mubr.f32.gmra.mrb[0].mxu0 %v1477
    %v1580 = vpop.f32.mrb[0].mxu0
    %v1581 = vadd.f32 0.0, %v1580
    %v1582 = vpop.f32.mrb[0].mxu0
    %1583 = vdwg.mxu0
    %v1584 = vtanh.pop %v1546
    %v1585 = vtanh.pop %v1551
    %v1586 = vtanh.pop %v1556
    %v1587 = vtanh.pop %v1561
    %v1588 = vtanh.pop %v1566
    %v1589 = vtanh.pop %v1571
    %v1590 = vtanh.pop %v1576
    %v1591 = vtanh.pop %v1581
    %v1592 = vsel %vm35, %v1584, 0.0
    %v1593 = vrot.slane %v1592, 4
    %v1594 = vadd.f32 %v1592, %v1593
    %v1595 = vrot.slane %v1594, 2
    %v1596 = vadd.f32 %v1594, %v1595
    %v1597 = vrot.slane %v1596, 1
    %v1598 = vadd.f32 %v1596, %v1597
    %v1599 = vsel %vm35, %v1585, 0.0
    %v1600 = vrot.slane %v1599, 4
    %v1601 = vadd.f32 %v1599, %v1600
    %v1602 = vrot.slane %v1601, 2
    %v1603 = vadd.f32 %v1601, %v1602
    %v1604 = vrot.slane %v1603, 1
    %v1605 = vadd.f32 %v1603, %v1604
    %v1606 = vsel %vm35, %v1586, 0.0
    %v1607 = vrot.slane %v1606, 4
    %v1608 = vadd.f32 %v1606, %v1607
    %v1609 = vrot.slane %v1608, 2
    %v1610 = vadd.f32 %v1608, %v1609
    %v1611 = vrot.slane %v1610, 1
    %v1612 = vadd.f32 %v1610, %v1611
    %v1613 = vsel %vm35, %v1587, 0.0
    %v1614 = vrot.slane %v1613, 4
    %v1615 = vadd.f32 %v1613, %v1614
    %v1616 = vrot.slane %v1615, 2
    %v1617 = vadd.f32 %v1615, %v1616
    %v1618 = vrot.slane %v1617, 1
    %v1619 = vadd.f32 %v1617, %v1618
    %v1620 = vsel %vm35, %v1588, 0.0
    %v1621 = vrot.slane %v1620, 4
    %v1622 = vadd.f32 %v1620, %v1621
    %v1623 = vrot.slane %v1622, 2
    %v1624 = vadd.f32 %v1622, %v1623
    %v1625 = vrot.slane %v1624, 1
    %v1626 = vadd.f32 %v1624, %v1625
    %v1627 = vsel %vm35, %v1589, 0.0
    %v1628 = vrot.slane %v1627, 4
    %v1629 = vadd.f32 %v1627, %v1628
    %v1630 = vrot.slane %v1629, 2
    %v1631 = vadd.f32 %v1629, %v1630
    %v1632 = vrot.slane %v1631, 1
    %v1633 = vadd.f32 %v1631, %v1632
    %v1634 = vsel %vm35, %v1590, 0.0
    %v1635 = vrot.slane %v1634, 4
    %v1636 = vadd.f32 %v1634, %v1635
    %v1637 = vrot.slane %v1636, 2
    %v1638 = vadd.f32 %v1636, %v1637
    %v1639 = vrot.slane %v1638, 1
    %v1640 = vadd.f32 %v1638, %v1639
    %v1641 = vsel %vm35, %v1591, 0.0
    %v1642 = vrot.slane %v1641, 4
    %v1643 = vadd.f32 %v1641, %v1642
    %v1644 = vrot.slane %v1643, 2
    %v1645 = vadd.f32 %v1643, %v1644
    %v1646 = vrot.slane %v1645, 1
    %v1647 = vadd.f32 %v1645, %v1646
    %v1648 = vmul.f32 %v1598, 0.125
    %v1649 = vmul.f32 %v1605, 0.125
    %v1650 = vmul.f32 %v1612, 0.125
    %v1651 = vmul.f32 %v1619, 0.125
    %v1652 = vmul.f32 %v1626, 0.125
    %v1653 = vmul.f32 %v1633, 0.125
    %v1654 = vmul.f32 %v1640, 0.125
    %v1655 = vmul.f32 %v1647, 0.125
    %vm1664 = vcmask 1041409
    %v1665 = vsel %vm1664, %v1649, %v1648
    %vm1666 = vcmask 1042434
    %v1667 = vsel %vm1666, %v1650, %v1665
    %vm1668 = vcmask 1043459
    %v1669 = vsel %vm1668, %v1651, %v1667
    %vm1670 = vcmask 1044484
    %v1671 = vsel %vm1670, %v1652, %v1669
    %vm1672 = vcmask 1045509
    %v1673 = vsel %vm1672, %v1653, %v1671
    %vm1674 = vcmask 1046534
    %v1675 = vsel %vm1674, %v1654, %v1673
    %vm1676 = vcmask 1047559
    %v1677 = vsel %vm1676, %v1655, %v1675
    %1679 = vst.msk [vmem:[#allocation2] sm:$0xff] %vm35, %v1677
    // Predicated region
    $region14: #{tpu_custom_call.1} parent=1 // pred_check
      _
    $region15: #{tpu_custom_call.1} parent=1 // pred_check_branch
      %1681 = sbr.rel (0) target = $region17
    $region16: #{tpu_custom_call.1} parent=1 // pred_region
      %s1683 = ssub.s32 128, 128
      %1684 = vsyncadd [#allocation3], %s1683
      %s1686 = sshll.u32 [#allocation2], 4
      %s1687 = int_to_ptr.vmem [resolvable:$true] %s1686
      %1689 = dma.vmem_to_hbm [thread:$0]  %s1687, 128, %s3, [#allocation3]
    $region17: #{tpu_custom_call.1} parent=1 // pred_fallthru
      _
    // Predicated region
    $region18: #{tpu_custom_call.1} parent=1 // pred_check
      _
    $region19: #{tpu_custom_call.1} parent=1 // pred_check_branch
      %1691 = sbr.rel (0) target = $region21
    $region20: #{tpu_custom_call.1} parent=1 // pred_region
      %1692 = dma.done [#allocation3], 128
    $region21: #{tpu_custom_call.1} parent=1 // pred_fallthru
      _
    %1693 = vsyncpa [#allocation3], 1

</llo_original>
